<compile_context>
chip_gen: v6e
topology: v6e:2x2x1
jax: 0.10.0
libtpu: 0.0.40
codegen_flags: <defaults>
</compile_context>

<pallas_src>
import jax
import jax.numpy as jnp
from jax.experimental import pallas as pl
from jax.experimental.pallas import tpu as pltpu

# ---------------- config (NeRFMLP semantics at small sizes) ----------------
MIN_DEG_POINT = 0
MAX_DEG_POINT = 4
DEG_VIEW = 2
NETDEPTH = 8
NETWIDTH = 64
NETDEPTH_CONDITION = 1
NETWIDTH_CONDITION = 32
SKIP_LAYER = 4
INPUT_CH = 3
INPUT_CH_VIEW = 3
NUM_RGB = 3
NUM_DENSITY = 2

POS_SIZE = ((MAX_DEG_POINT - MIN_DEG_POINT) * 2 + 1) * INPUT_CH        # 27
VIEW_POS_SIZE = (DEG_VIEW * 2 + 1) * INPUT_CH_VIEW                     # 15
NOUT = NUM_RGB + NUM_DENSITY                                           # 5


def _round_up(a, b):
    return (a + b - 1) // b * b


# ---------------- deterministic parameter init ----------------
def _xavier(key, fan_in, fan_out):
    # matches init.xavier_uniform_ bound (stored transposed: (in, out))
    bound = (6.0 / (fan_in + fan_out)) ** 0.5
    return jax.random.uniform(key, (fan_in, fan_out), jnp.float32, -bound, bound)


def _bias(key, fan_in, fan_out):
    # matches nn.Linear default bias init: U(-1/sqrt(fan_in), 1/sqrt(fan_in))
    bound = 1.0 / (fan_in ** 0.5)
    return jax.random.uniform(key, (1, fan_out), jnp.float32, -bound, bound)


def init_params(key):
    ks = jax.random.split(key, 24)
    ki = iter(range(24))
    params = []

    # pts_linears input dims (layer 5 takes netwidth + pos_size because of the skip)
    pts_in = [POS_SIZE]
    for layer in range(1, NETDEPTH):
        if (layer - 1) % SKIP_LAYER == 0 and (layer - 1) > 0:
            pts_in.append(NETWIDTH + POS_SIZE)
        else:
            pts_in.append(NETWIDTH)

    for layer in range(NETDEPTH):
        fi = pts_in[layer]
        w = _xavier(ks[next(ki)], fi, NETWIDTH)
        b = _bias(ks[next(ki)], fi, NETWIDTH)
        if fi == NETWIDTH + POS_SIZE:
            # split the skip-layer weight: rows [0:NETWIDTH] act on h,
            # rows [NETWIDTH:] act on the original inputs.
            params += [w[:NETWIDTH], w[NETWIDTH:], b]
        else:
            params += [w, b]

    # density layer
    params += [_xavier(ks[next(ki)], NETWIDTH, NUM_DENSITY),
               _bias(ks[next(ki)], NETWIDTH, NUM_DENSITY)]
    # bottleneck layer
    params += [_xavier(ks[next(ki)], NETWIDTH, NETWIDTH),
               _bias(ks[next(ki)], NETWIDTH, NETWIDTH)]
    # views_linear[0]: input = concat([bottleneck, condition]) -> split weight
    wv = _xavier(ks[next(ki)], NETWIDTH + VIEW_POS_SIZE, NETWIDTH_CONDITION)
    bv = _bias(ks[next(ki)], NETWIDTH + VIEW_POS_SIZE, NETWIDTH_CONDITION)
    params += [wv[:NETWIDTH], wv[NETWIDTH:], bv]
    # rgb layer
    params += [_xavier(ks[next(ki)], NETWIDTH_CONDITION, NUM_RGB),
               _bias(ks[next(ki)], NETWIDTH_CONDITION, NUM_RGB)]
    return params


# ---------------- pack raw params into kernel-friendly refs ----------------
def pack_params(params):
    (w0, b0, w1, b1, w2, b2, w3, b3, w4, b4,
     w5a, w5b, b5, w6, b6, w7, b7,
     wd, bd, wbt, bbt, wvb, wvc, bv, wr, br) = params
    bf16 = jnp.bfloat16
    f32 = jnp.float32

    # N-fusion (a): [layer-0 weight | layer-5 "inputs" half of the skip weight]
    # -> one (27, 128) dot per tile; cols 64:128 cached as the skip contribution.
    w_in = jnp.concatenate([w0, w5b], axis=1).astype(bf16)                    # (27, 128)

    # interior 64x64 layers 1..7 (w5a is the "h" half of the skip layer)
    w_mid = jnp.stack([w1, w2, w3, w4, w5a, w6, w7]).astype(bf16)             # (7, 64, 64)

    # biases for layers 0..7 + bottleneck (kept f32)
    b64 = jnp.concatenate([b0, b1, b2, b3, b4, b5, b6, b7, bbt],
                          axis=0).astype(f32)                                 # (9, 64)

    # N-fusion (b): [bottleneck weight | zero-padded density head]
    # -> one (64, 69) dot: cols 0:64 = bottleneck, cols 64:69 = [0,0,0, h@wd].
    woh = jnp.concatenate([jnp.zeros((NETWIDTH, NUM_RGB), f32), wd], axis=1)  # (64, 5)
    w_bt_dens = jnp.concatenate([wbt, woh], axis=1).astype(bf16)              # (64, 69)

    # Fused output head: out = v @ [wr | 0] + hbig[:, 64:69] + [br | bd]
    wov = jnp.concatenate(
        [wr, jnp.zeros((NETWIDTH_CONDITION, NUM_DENSITY), f32)], axis=1).astype(bf16)  # (32, 5)
    bo = jnp.concatenate([br, bd], axis=1).astype(f32)                                  # (1, 5)

    kparams = [w_in, w_mid, b64, wvb.astype(bf16), w_bt_dens, wov, bo]
    # wvc / bv are consumed in the wrapper (condition projection hoisted out).
    return kparams, (wvc.astype(bf16), bv.astype(f32))


# ---------------- Pallas kernel ----------------
def nerf_mlp_kernel(x_ref, cb_ref,
                    w_in, w_mid, b64, wvb, w_bt_dens, wov, bo,
                    out_ref):
    f32 = jnp.float32
    bf16 = jnp.bfloat16

    def mm(a16, w16):
        # bf16 operands, f32 MXU accumulation
        return jnp.dot(a16, w16, preferred_element_type=f32)

    def relu16(t):
        # bias-add / ReLU in f32 (v5e-safe); carry the activation in bf16
        return jnp.maximum(t, 0.0).astype(bf16)

    x16 = x_ref[...]                                  # (tile, 27) bf16 already

    # layer 0 fused with the layer-5 skip weight: single (27, 128) dot
    xproj = mm(x16, w_in[...])                        # (tile, 128) f32
    skip = xproj[:, NETWIDTH:]                        # cached skip contribution
    h = relu16(xproj[:, :NETWIDTH] + b64[0:1])        # layer 0

    for l in range(1, 5):                             # layers 1..4
        h = relu16(mm(h, w_mid[l - 1]) + b64[l:l + 1])
    # layer 5 (skip): cat([h, inputs]) @ W5 == h @ W5[:64] + (x @ W5[64:]) [cached]
    h = relu16(mm(h, w_mid[4]) + skip + b64[5:6])
    h = relu16(mm(h, w_mid[5]) + b64[6:7])            # layer 6
    h = relu16(mm(h, w_mid[6]) + b64[7:8])            # layer 7

    # bottleneck + density head fused into one (64, 69) dot
    hbig = mm(h, w_bt_dens[...])                      # (tile, 69) f32
    btl16 = (hbig[:, :NETWIDTH] + b64[8:9]).astype(bf16)
    dens = hbig[:, NETWIDTH:]                         # (tile, 5) = [0, 0, 0, h@wd]

    # view branch; cond @ Wv_cond + bv was hoisted to the wrapper (cb_ref, f32)
    v16 = relu16(mm(btl16, wvb[...]) + cb_ref[...])

    # fused heads, single width-5 store: cols [0:3]=rgb, [3:5]=(density, is_fog)
    out_ref[...] = mm(v16, wov[...]) + dens + bo[...]


# ---------------- wrapper ----------------
def nerf_mlp_forward(x, condition, params, n_tile=1024):
    B, S, F = x.shape
    assert F == POS_SIZE
    N = B * S

    # Large row tiles amortize per-grid-step overhead and per-dot RHS loads,
    # but keep ~>=8 grid steps when N allows so v7x's two TensorCores each get
    # several steps and the DMA/compute pipeline stays full.  Tiles are
    # multiples of 8 (sublane); padded rows are sliced off below.
    n_tile = max(8, min(int(n_tile), _round_up(pl.cdiv(N, 8), 8)))
    N_pad = _round_up(N, n_tile)
    grid = (N_pad // n_tile,)

    kparams, (wvc16, bv) = pack_params(params)

    # x is only ever a bf16 matmul operand -> ship it as bf16.
    x_flat = x.reshape(N, F).astype(jnp.bfloat16)

    # Hoist the per-batch-row condition projection out of the kernel: every
    # sample of a ray shares the same condition, so cond @ Wv_cond + bv is
    # computed once per ray here (tiny) and broadcast per sample, removing one
    # MXU pass per row tile.  Kept in f32 to stay a numerical twin of the
    # reference; row order matches torch.tile(cond[:,None],(1,S,1)).reshape(-1,.).
    cond_bias = jnp.dot(condition.astype(jnp.bfloat16), wvc16,
                        preferred_element_type=jnp.float32) + bv          # (B, 32)
    cond_rep = jnp.repeat(cond_bias, S, axis=0)                           # (N, 32) f32

    if N_pad != N:
        pad = N_pad - N
        x_flat = jnp.pad(x_flat, ((0, pad), (0, 0)))
        cond_rep = jnp.pad(cond_rep, ((0, pad), (0, 0)))

    def row_spec(width):
        return pl.BlockSpec((n_tile, width), lambda i: (i, 0))

    def const_spec(a):
        nd = a.ndim
        return pl.BlockSpec(a.shape, lambda i, _nd=nd: (0,) * _nd)

    in_specs = ([row_spec(F), row_spec(NETWIDTH_CONDITION)]
                + [const_spec(p) for p in kparams])

    out = pl.pallas_call(
        nerf_mlp_kernel,
        out_shape=jax.ShapeDtypeStruct((N_pad, NOUT), jnp.float32),
        grid_spec=pltpu.PrefetchScalarGridSpec(
            num_scalar_prefetch=0,
            grid=grid,
            in_specs=in_specs,
            out_specs=row_spec(NOUT),
        ),
        compiler_params=pltpu.CompilerParams(
            dimension_semantics=("parallel",)),
    )(x_flat, cond_rep, *kparams)

    out = out[:N]
    raw_rgb = out[:, :NUM_RGB].reshape(B, S, NUM_RGB)
    dens_fog = out[:, NUM_RGB:].reshape(B, S, NUM_DENSITY)
    return raw_rgb, dens_fog[..., 0], dens_fog[..., 1]


# ---------------- plain-JAX reference (numerical twin of the kernel) ----------------
def nerf_mlp_reference(x, condition, params):
    (w0, b0, w1, b1, w2, b2, w3, b3, w4, b4,
     w5a, w5b, b5, w6, b6, w7, b7,
     wd, bd, wbt, bbt, wvb, wvc, bv, wr, br) = params
    B, S, F = x.shape
    xf = x.reshape(-1, F)
    cond = jnp.repeat(condition, S, axis=0)
    bf16 = jnp.bfloat16

    def mm(a, w):
        return jnp.dot(a.astype(bf16), w.astype(bf16),
                       preferred_element_type=jnp.float32)

    relu = jax.nn.relu
    h = relu(mm(xf, w0) + b0)
    h = relu(mm(h, w1) + b1)
    h = relu(mm(h, w2) + b2)
    h = relu(mm(h, w3) + b3)
    h = relu(mm(h, w4) + b4)
    h = relu(mm(h, w5a) + mm(xf, w5b) + b5)
    h = relu(mm(h, w6) + b6)
    h = relu(mm(h, w7) + b7)
    dens = (mm(h, wd) + bd).reshape(B, S, NUM_DENSITY)
    btl = mm(h, wbt) + bbt
    v = relu(mm(btl, wvb) + mm(cond, wvc) + bv)
    rgb = (mm(v, wr) + br).reshape(B, S, NUM_RGB)
    return rgb, dens[..., 0], dens[..., 1]


if __name__ == "__main__":
    key = jax.random.PRNGKey(0)
    kx, kc, kp = jax.random.split(key, 3)

    batch = 2
    num_samples = 8
    x = jax.random.normal(kx, (batch, num_samples, POS_SIZE), jnp.float32)
    condition = jax.random.normal(kc, (batch, VIEW_POS_SIZE), jnp.float32)
    params = init_params(kp)

    rgb, density, is_fog = nerf_mlp_forward(x, condition, params)
    jax.block_until_ready((rgb, density, is_fog))

    rgb_r, den_r, fog_r = nerf_mlp_reference(x, condition, params)
    assert rgb.shape == (batch, num_samples, NUM_RGB)
    assert density.shape == (batch, num_samples)
    assert is_fog.shape == (batch, num_samples)
    assert jnp.allclose(rgb, rgb_r, atol=1e-2, rtol=1e-2)
    assert jnp.allclose(density, den_r, atol=1e-2, rtol=1e-2)
    assert jnp.allclose(is_fog, fog_r, atol=1e-2, rtol=1e-2)

    print("KERNEL_OK")
</pallas_src>

<mosaic_0001>
module attributes {stable_mosaic.version = 11 : i64} {
  func.func @nerf_mlp_kernel(%arg0: i32, %arg1: memref<8x27xbf16, #tpu.memory_space<vmem>>, %arg2: memref<8x32xf32, #tpu.memory_space<vmem>>, %arg3: memref<27x128xbf16, #tpu.memory_space<vmem>>, %arg4: memref<7x64x64xbf16, #tpu.memory_space<vmem>>, %arg5: memref<9x64xf32, #tpu.memory_space<vmem>>, %arg6: memref<64x32xbf16, #tpu.memory_space<vmem>>, %arg7: memref<64x69xbf16, #tpu.memory_space<vmem>>, %arg8: memref<32x5xbf16, #tpu.memory_space<vmem>>, %arg9: memref<1x5xf32, #tpu.memory_space<vmem>>, %arg10: memref<8x5xf32, #tpu.memory_space<vmem>>) attributes {dimension_semantics = [#tpu.dimension_semantics<parallel>], iteration_bounds = array<i64: 2>, scalar_prefetch = 0 : i64, scratch_operands = 0 : i64, tpu.core_type = #tpu.core_type<tc>, window_params = [{transform_indices = @transform_0, window_bounds = array<i64: 8, 27>}, {transform_indices = @transform_1, window_bounds = array<i64: 8, 32>}, {pipeline_mode = #tpu.pipeline_mode<synchronous>, transform_indices = @transform_2, window_bounds = array<i64: 27, 128>}, {pipeline_mode = #tpu.pipeline_mode<synchronous>, transform_indices = @transform_3, window_bounds = array<i64: 7, 64, 64>}, {pipeline_mode = #tpu.pipeline_mode<synchronous>, transform_indices = @transform_4, window_bounds = array<i64: 9, 64>}, {pipeline_mode = #tpu.pipeline_mode<synchronous>, transform_indices = @transform_5, window_bounds = array<i64: 64, 32>}, {pipeline_mode = #tpu.pipeline_mode<synchronous>, transform_indices = @transform_6, window_bounds = array<i64: 64, 69>}, {pipeline_mode = #tpu.pipeline_mode<synchronous>, transform_indices = @transform_7, window_bounds = array<i64: 32, 5>}, {pipeline_mode = #tpu.pipeline_mode<synchronous>, transform_indices = @transform_8, window_bounds = array<i64: 1, 5>}, {transform_indices = @transform_9, window_bounds = array<i64: 8, 5>}]} {
    %c0 = arith.constant 0 : index
    %c0_0 = arith.constant 0 : index
    %0 = vector.load %arg1[%c0, %c0_0] : memref<8x27xbf16, #tpu.memory_space<vmem>>, vector<8x27xbf16>
    %c0_1 = arith.constant 0 : index
    %c0_2 = arith.constant 0 : index
    %1 = vector.load %arg3[%c0_1, %c0_2] : memref<27x128xbf16, #tpu.memory_space<vmem>>, vector<27x128xbf16>
    %cst = arith.constant dense<0.000000e+00> : vector<8x128xf32>
    %2 = tpu.matmul %0, %1, %cst {dimension_numbers = #tpu.dot_dimension_numbers<[1], [0], [0], [1], [0, 0, 1, 1], [], []>} : vector<8x27xbf16>, vector<27x128xbf16>, vector<8x128xf32> -> vector<8x128xf32>
    %3 = vector.extract_strided_slice %2 {offsets = [0, 64], sizes = [8, 64], strides = [1, 1]} : vector<8x128xf32> to vector<8x64xf32>
    %4 = vector.extract_strided_slice %2 {offsets = [0, 0], sizes = [8, 64], strides = [1, 1]} : vector<8x128xf32> to vector<8x64xf32>
    %c0_3 = arith.constant 0 : index
    %c0_4 = arith.constant 0 : index
    %5 = vector.load %arg5[%c0_3, %c0_4] : memref<9x64xf32, #tpu.memory_space<vmem>>, vector<1x64xf32>
    %6 = vector.broadcast %5 : vector<1x64xf32> to vector<8x64xf32>
    %7 = arith.addf %4, %6 : vector<8x64xf32>
    %cst_5 = arith.constant 0.000000e+00 : f32
    %8 = vector.broadcast %cst_5 : f32 to vector<8x64xf32>
    %9 = arith.maximumf %7, %8 : vector<8x64xf32>
    %10 = arith.truncf %9 : vector<8x64xf32> to vector<8x64xbf16>
    %c0_6 = arith.constant 0 : index
    %c0_7 = arith.constant 0 : index
    %c0_8 = arith.constant 0 : index
    %11 = vector.load %arg4[%c0_6, %c0_7, %c0_8] : memref<7x64x64xbf16, #tpu.memory_space<vmem>>, vector<1x64x64xbf16>
    %12 = vector.shape_cast %11 : vector<1x64x64xbf16> to vector<64x64xbf16>
    %cst_9 = arith.constant dense<0.000000e+00> : vector<8x64xf32>
    %13 = tpu.matmul %10, %12, %cst_9 {dimension_numbers = #tpu.dot_dimension_numbers<[1], [0], [0], [1], [0, 0, 1, 1], [], []>} : vector<8x64xbf16>, vector<64x64xbf16>, vector<8x64xf32> -> vector<8x64xf32>
    %c1 = arith.constant 1 : index
    %c0_10 = arith.constant 0 : index
    %14 = vector.load %arg5[%c1, %c0_10] : memref<9x64xf32, #tpu.memory_space<vmem>>, vector<1x64xf32>
    %15 = vector.broadcast %14 : vector<1x64xf32> to vector<8x64xf32>
    %16 = arith.addf %13, %15 : vector<8x64xf32>
    %cst_11 = arith.constant 0.000000e+00 : f32
    %17 = vector.broadcast %cst_11 : f32 to vector<8x64xf32>
    %18 = arith.maximumf %16, %17 : vector<8x64xf32>
    %19 = arith.truncf %18 : vector<8x64xf32> to vector<8x64xbf16>
    %c1_12 = arith.constant 1 : index
    %c0_13 = arith.constant 0 : index
    %c0_14 = arith.constant 0 : index
    %20 = vector.load %arg4[%c1_12, %c0_13, %c0_14] : memref<7x64x64xbf16, #tpu.memory_space<vmem>>, vector<1x64x64xbf16>
    %21 = vector.shape_cast %20 : vector<1x64x64xbf16> to vector<64x64xbf16>
    %cst_15 = arith.constant dense<0.000000e+00> : vector<8x64xf32>
    %22 = tpu.matmul %19, %21, %cst_15 {dimension_numbers = #tpu.dot_dimension_numbers<[1], [0], [0], [1], [0, 0, 1, 1], [], []>} : vector<8x64xbf16>, vector<64x64xbf16>, vector<8x64xf32> -> vector<8x64xf32>
    %c2 = arith.constant 2 : index
    %c0_16 = arith.constant 0 : index
    %23 = vector.load %arg5[%c2, %c0_16] : memref<9x64xf32, #tpu.memory_space<vmem>>, vector<1x64xf32>
    %24 = vector.broadcast %23 : vector<1x64xf32> to vector<8x64xf32>
    %25 = arith.addf %22, %24 : vector<8x64xf32>
    %cst_17 = arith.constant 0.000000e+00 : f32
    %26 = vector.broadcast %cst_17 : f32 to vector<8x64xf32>
    %27 = arith.maximumf %25, %26 : vector<8x64xf32>
    %28 = arith.truncf %27 : vector<8x64xf32> to vector<8x64xbf16>
    %c2_18 = arith.constant 2 : index
    %c0_19 = arith.constant 0 : index
    %c0_20 = arith.constant 0 : index
    %29 = vector.load %arg4[%c2_18, %c0_19, %c0_20] : memref<7x64x64xbf16, #tpu.memory_space<vmem>>, vector<1x64x64xbf16>
    %30 = vector.shape_cast %29 : vector<1x64x64xbf16> to vector<64x64xbf16>
    %cst_21 = arith.constant dense<0.000000e+00> : vector<8x64xf32>
    %31 = tpu.matmul %28, %30, %cst_21 {dimension_numbers = #tpu.dot_dimension_numbers<[1], [0], [0], [1], [0, 0, 1, 1], [], []>} : vector<8x64xbf16>, vector<64x64xbf16>, vector<8x64xf32> -> vector<8x64xf32>
    %c3 = arith.constant 3 : index
    %c0_22 = arith.constant 0 : index
    %32 = vector.load %arg5[%c3, %c0_22] : memref<9x64xf32, #tpu.memory_space<vmem>>, vector<1x64xf32>
    %33 = vector.broadcast %32 : vector<1x64xf32> to vector<8x64xf32>
    %34 = arith.addf %31, %33 : vector<8x64xf32>
    %cst_23 = arith.constant 0.000000e+00 : f32
    %35 = vector.broadcast %cst_23 : f32 to vector<8x64xf32>
    %36 = arith.maximumf %34, %35 : vector<8x64xf32>
    %37 = arith.truncf %36 : vector<8x64xf32> to vector<8x64xbf16>
    %c3_24 = arith.constant 3 : index
    %c0_25 = arith.constant 0 : index
    %c0_26 = arith.constant 0 : index
    %38 = vector.load %arg4[%c3_24, %c0_25, %c0_26] : memref<7x64x64xbf16, #tpu.memory_space<vmem>>, vector<1x64x64xbf16>
    %39 = vector.shape_cast %38 : vector<1x64x64xbf16> to vector<64x64xbf16>
    %cst_27 = arith.constant dense<0.000000e+00> : vector<8x64xf32>
    %40 = tpu.matmul %37, %39, %cst_27 {dimension_numbers = #tpu.dot_dimension_numbers<[1], [0], [0], [1], [0, 0, 1, 1], [], []>} : vector<8x64xbf16>, vector<64x64xbf16>, vector<8x64xf32> -> vector<8x64xf32>
    %c4 = arith.constant 4 : index
    %c0_28 = arith.constant 0 : index
    %41 = vector.load %arg5[%c4, %c0_28] : memref<9x64xf32, #tpu.memory_space<vmem>>, vector<1x64xf32>
    %42 = vector.broadcast %41 : vector<1x64xf32> to vector<8x64xf32>
    %43 = arith.addf %40, %42 : vector<8x64xf32>
    %cst_29 = arith.constant 0.000000e+00 : f32
    %44 = vector.broadcast %cst_29 : f32 to vector<8x64xf32>
    %45 = arith.maximumf %43, %44 : vector<8x64xf32>
    %46 = arith.truncf %45 : vector<8x64xf32> to vector<8x64xbf16>
    %c4_30 = arith.constant 4 : index
    %c0_31 = arith.constant 0 : index
    %c0_32 = arith.constant 0 : index
    %47 = vector.load %arg4[%c4_30, %c0_31, %c0_32] : memref<7x64x64xbf16, #tpu.memory_space<vmem>>, vector<1x64x64xbf16>
    %48 = vector.shape_cast %47 : vector<1x64x64xbf16> to vector<64x64xbf16>
    %cst_33 = arith.constant dense<0.000000e+00> : vector<8x64xf32>
    %49 = tpu.matmul %46, %48, %cst_33 {dimension_numbers = #tpu.dot_dimension_numbers<[1], [0], [0], [1], [0, 0, 1, 1], [], []>} : vector<8x64xbf16>, vector<64x64xbf16>, vector<8x64xf32> -> vector<8x64xf32>
    %50 = arith.addf %49, %3 : vector<8x64xf32>
    %c5 = arith.constant 5 : index
    %c0_34 = arith.constant 0 : index
    %51 = vector.load %arg5[%c5, %c0_34] : memref<9x64xf32, #tpu.memory_space<vmem>>, vector<1x64xf32>
    %52 = vector.broadcast %51 : vector<1x64xf32> to vector<8x64xf32>
    %53 = arith.addf %50, %52 : vector<8x64xf32>
    %cst_35 = arith.constant 0.000000e+00 : f32
    %54 = vector.broadcast %cst_35 : f32 to vector<8x64xf32>
    %55 = arith.maximumf %53, %54 : vector<8x64xf32>
    %56 = arith.truncf %55 : vector<8x64xf32> to vector<8x64xbf16>
    %c5_36 = arith.constant 5 : index
    %c0_37 = arith.constant 0 : index
    %c0_38 = arith.constant 0 : index
    %57 = vector.load %arg4[%c5_36, %c0_37, %c0_38] : memref<7x64x64xbf16, #tpu.memory_space<vmem>>, vector<1x64x64xbf16>
    %58 = vector.shape_cast %57 : vector<1x64x64xbf16> to vector<64x64xbf16>
    %cst_39 = arith.constant dense<0.000000e+00> : vector<8x64xf32>
    %59 = tpu.matmul %56, %58, %cst_39 {dimension_numbers = #tpu.dot_dimension_numbers<[1], [0], [0], [1], [0, 0, 1, 1], [], []>} : vector<8x64xbf16>, vector<64x64xbf16>, vector<8x64xf32> -> vector<8x64xf32>
    %c6 = arith.constant 6 : index
    %c0_40 = arith.constant 0 : index
    %60 = vector.load %arg5[%c6, %c0_40] : memref<9x64xf32, #tpu.memory_space<vmem>>, vector<1x64xf32>
    %61 = vector.broadcast %60 : vector<1x64xf32> to vector<8x64xf32>
    %62 = arith.addf %59, %61 : vector<8x64xf32>
    %cst_41 = arith.constant 0.000000e+00 : f32
    %63 = vector.broadcast %cst_41 : f32 to vector<8x64xf32>
    %64 = arith.maximumf %62, %63 : vector<8x64xf32>
    %65 = arith.truncf %64 : vector<8x64xf32> to vector<8x64xbf16>
    %c6_42 = arith.constant 6 : index
    %c0_43 = arith.constant 0 : index
    %c0_44 = arith.constant 0 : index
    %66 = vector.load %arg4[%c6_42, %c0_43, %c0_44] : memref<7x64x64xbf16, #tpu.memory_space<vmem>>, vector<1x64x64xbf16>
    %67 = vector.shape_cast %66 : vector<1x64x64xbf16> to vector<64x64xbf16>
    %cst_45 = arith.constant dense<0.000000e+00> : vector<8x64xf32>
    %68 = tpu.matmul %65, %67, %cst_45 {dimension_numbers = #tpu.dot_dimension_numbers<[1], [0], [0], [1], [0, 0, 1, 1], [], []>} : vector<8x64xbf16>, vector<64x64xbf16>, vector<8x64xf32> -> vector<8x64xf32>
    %c7 = arith.constant 7 : index
    %c0_46 = arith.constant 0 : index
    %69 = vector.load %arg5[%c7, %c0_46] : memref<9x64xf32, #tpu.memory_space<vmem>>, vector<1x64xf32>
    %70 = vector.broadcast %69 : vector<1x64xf32> to vector<8x64xf32>
    %71 = arith.addf %68, %70 : vector<8x64xf32>
    %cst_47 = arith.constant 0.000000e+00 : f32
    %72 = vector.broadcast %cst_47 : f32 to vector<8x64xf32>
    %73 = arith.maximumf %71, %72 : vector<8x64xf32>
    %74 = arith.truncf %73 : vector<8x64xf32> to vector<8x64xbf16>
    %c0_48 = arith.constant 0 : index
    %c0_49 = arith.constant 0 : index
    %75 = vector.load %arg7[%c0_48, %c0_49] : memref<64x69xbf16, #tpu.memory_space<vmem>>, vector<64x69xbf16>
    %cst_50 = arith.constant dense<0.000000e+00> : vector<8x69xf32>
    %76 = tpu.matmul %74, %75, %cst_50 {dimension_numbers = #tpu.dot_dimension_numbers<[1], [0], [0], [1], [0, 0, 1, 1], [], []>} : vector<8x64xbf16>, vector<64x69xbf16>, vector<8x69xf32> -> vector<8x69xf32>
    %77 = vector.extract_strided_slice %76 {offsets = [0, 0], sizes = [8, 64], strides = [1, 1]} : vector<8x69xf32> to vector<8x64xf32>
    %c8 = arith.constant 8 : index
    %c0_51 = arith.constant 0 : index
    %78 = vector.load %arg5[%c8, %c0_51] : memref<9x64xf32, #tpu.memory_space<vmem>>, vector<1x64xf32>
    %79 = vector.broadcast %78 : vector<1x64xf32> to vector<8x64xf32>
    %80 = arith.addf %77, %79 : vector<8x64xf32>
    %81 = arith.truncf %80 : vector<8x64xf32> to vector<8x64xbf16>
    %82 = vector.extract_strided_slice %76 {offsets = [0, 64], sizes = [8, 5], strides = [1, 1]} : vector<8x69xf32> to vector<8x5xf32>
    %c0_52 = arith.constant 0 : index
    %c0_53 = arith.constant 0 : index
    %83 = vector.load %arg6[%c0_52, %c0_53] : memref<64x32xbf16, #tpu.memory_space<vmem>>, vector<64x32xbf16>
    %cst_54 = arith.constant dense<0.000000e+00> : vector<8x32xf32>
    %84 = tpu.matmul %81, %83, %cst_54 {dimension_numbers = #tpu.dot_dimension_numbers<[1], [0], [0], [1], [0, 0, 1, 1], [], []>} : vector<8x64xbf16>, vector<64x32xbf16>, vector<8x32xf32> -> vector<8x32xf32>
    %c0_55 = arith.constant 0 : index
    %c0_56 = arith.constant 0 : index
    %85 = vector.load %arg2[%c0_55, %c0_56] : memref<8x32xf32, #tpu.memory_space<vmem>>, vector<8x32xf32>
    %86 = arith.addf %84, %85 : vector<8x32xf32>
    %cst_57 = arith.constant 0.000000e+00 : f32
    %87 = vector.broadcast %cst_57 : f32 to vector<8x32xf32>
    %88 = arith.maximumf %86, %87 : vector<8x32xf32>
    %89 = arith.truncf %88 : vector<8x32xf32> to vector<8x32xbf16>
    %c0_58 = arith.constant 0 : index
    %c0_59 = arith.constant 0 : index
    %90 = vector.load %arg8[%c0_58, %c0_59] : memref<32x5xbf16, #tpu.memory_space<vmem>>, vector<32x5xbf16>
    %cst_60 = arith.constant dense<0.000000e+00> : vector<8x5xf32>
    %91 = tpu.matmul %89, %90, %cst_60 {dimension_numbers = #tpu.dot_dimension_numbers<[1], [0], [0], [1], [0, 0, 1, 1], [], []>} : vector<8x32xbf16>, vector<32x5xbf16>, vector<8x5xf32> -> vector<8x5xf32>
    %92 = arith.addf %91, %82 : vector<8x5xf32>
    %c0_61 = arith.constant 0 : index
    %c0_62 = arith.constant 0 : index
    %93 = vector.load %arg9[%c0_61, %c0_62] : memref<1x5xf32, #tpu.memory_space<vmem>>, vector<1x5xf32>
    %94 = vector.broadcast %93 : vector<1x5xf32> to vector<8x5xf32>
    %95 = arith.addf %92, %94 : vector<8x5xf32>
    %c0_63 = arith.constant 0 : index
    %c0_64 = arith.constant 0 : index
    %96 = vector.load %arg10[%c0_63, %c0_64] : memref<8x5xf32, #tpu.memory_space<vmem>>, vector<8x5xf32>
    tpu.vector_store %arg10[%c0_63, %c0_64], %95 {strides = array<i32>} : memref<8x5xf32, #tpu.memory_space<vmem>>, vector<8x5xf32>,
    return
  }
  func.func @transform_0(%arg0: i32) -> (i32, i32) {
    %c0_i32 = arith.constant 0 : i32
    %c0_i32_0 = arith.constant 0 : i32
    return %arg0, %c0_i32 : i32, i32
  }
  func.func @transform_1(%arg0: i32) -> (i32, i32) {
    %c0_i32 = arith.constant 0 : i32
    %c0_i32_0 = arith.constant 0 : i32
    return %arg0, %c0_i32 : i32, i32
  }
  func.func @transform_2(%arg0: i32) -> (i32, i32) {
    %c0_i32 = arith.constant 0 : i32
    %c0_i32_0 = arith.constant 0 : i32
    %c0_i32_1 = arith.constant 0 : i32
    return %c0_i32, %c0_i32_0 : i32, i32
  }
  func.func @transform_3(%arg0: i32) -> (i32, i32, i32) {
    %c0_i32 = arith.constant 0 : i32
    %c0_i32_0 = arith.constant 0 : i32
    %c0_i32_1 = arith.constant 0 : i32
    %c0_i32_2 = arith.constant 0 : i32
    return %c0_i32, %c0_i32_0, %c0_i32_1 : i32, i32, i32
  }
  func.func @transform_4(%arg0: i32) -> (i32, i32) {
    %c0_i32 = arith.constant 0 : i32
    %c0_i32_0 = arith.constant 0 : i32
    %c0_i32_1 = arith.constant 0 : i32
    return %c0_i32, %c0_i32_0 : i32, i32
  }
  func.func @transform_5(%arg0: i32) -> (i32, i32) {
    %c0_i32 = arith.constant 0 : i32
    %c0_i32_0 = arith.constant 0 : i32
    %c0_i32_1 = arith.constant 0 : i32
    return %c0_i32, %c0_i32_0 : i32, i32
  }
  func.func @transform_6(%arg0: i32) -> (i32, i32) {
    %c0_i32 = arith.constant 0 : i32
    %c0_i32_0 = arith.constant 0 : i32
    %c0_i32_1 = arith.constant 0 : i32
    return %c0_i32, %c0_i32_0 : i32, i32
  }
  func.func @transform_7(%arg0: i32) -> (i32, i32) {
    %c0_i32 = arith.constant 0 : i32
    %c0_i32_0 = arith.constant 0 : i32
    %c0_i32_1 = arith.constant 0 : i32
    return %c0_i32, %c0_i32_0 : i32, i32
  }
  func.func @transform_8(%arg0: i32) -> (i32, i32) {
    %c0_i32 = arith.constant 0 : i32
    %c0_i32_0 = arith.constant 0 : i32
    %c0_i32_1 = arith.constant 0 : i32
    return %c0_i32, %c0_i32_0 : i32, i32
  }
  func.func @transform_9(%arg0: i32) -> (i32, i32) {
    %c0_i32 = arith.constant 0 : i32
    %c0_i32_0 = arith.constant 0 : i32
    return %arg0, %c0_i32 : i32, i32
  }
}

</mosaic_0001>

<llo_original>
// kernel: tpu_custom_call.1
$region0: #{tpu_custom_call.1}
  #allocation0 [shape = 'u32[]', space=smem, size = 0x4, offset = 0x4, fixed_abs, tag = 'smem constant byte address 0x4 - core index']
  #allocation1 [shape = 'u32[144,128]{1,0:T(1,128)}', space=vmem, size = 0x12000, scoped, tag = 'internal scratch']
  %s0 = inlined_call_operand.vmem [shape: bf16[16,27], index: 0, kind: input, shape index: {}]
  %s1 = inlined_call_operand.vmem [shape: f32[16,32], index: 1, kind: input, shape index: {}]
  %s2 = inlined_call_operand.hbm [shape: bf16[27,128], index: 2, kind: input, shape index: {}]
  %s3 = inlined_call_operand.hbm [shape: bf16[7,64,64], index: 3, kind: input, shape index: {}]
  %s4 = inlined_call_operand.hbm [shape: f32[9,64], index: 4, kind: input, shape index: {}]
  %s5 = inlined_call_operand.vmem [shape: bf16[64,32], index: 5, kind: input, shape index: {}]
  %s6 = inlined_call_operand.vmem [shape: bf16[64,69], index: 6, kind: input, shape index: {}]
  %s7 = inlined_call_operand.vmem [shape: bf16[32,5], index: 7, kind: input, shape index: {}]
  %s8 = inlined_call_operand.vmem [shape: f32[1,5], index: 8, kind: input, shape index: {}]
  %s9 = inlined_call_operand.vmem [shape: f32[16,5], index: 9, kind: output, shape index: {}]
  %s10 = sld [smem:[#allocation0]]
  $region81: #{tpu_custom_call.1} parent=0
    _
  %s12 = ssub.s32 1, %s10
  %s13 = scalar_select 0, %s12, %s10
  $region1: #{tpu_custom_call.1} parent=0
    #allocation2 [shape = 'u8[8192]{0}', space=vmem, size = 0x2000, scoped, tag = 'input window, operand 2, single buffered']
    #allocation3 [shape = 's32[2]{0}', space=sflag, size = 0x8, scoped, tag = 'scoped memory for tpu_custom_call.1']
    #allocation4 [shape = 'u8[114688]{0}', space=vmem, size = 0x1c000, scoped, tag = 'input window, operand 3, single buffered']
    #allocation5 [shape = 's32[1]{0}', space=sflag, size = 0x4, scoped, tag = 'scoped memory for tpu_custom_call.1']
    #allocation6 [shape = 'u8[8192]{0}', space=vmem, size = 0x2000, scoped, tag = 'input window, operand 4, single buffered']
    %14 = vsyncpa [#allocation3], 0
    %15 = vsyncpa [#allocation5], 0
    loop: start=0, step=1, limit=4
    $region2: #{tpu_custom_call.1} parent=1 // loop_pre_header
      _
    $region3: #{tpu_custom_call.1} parent=1 // loop_header
      %s17 = sphi 0, %s21
      %p18 = scmp.ge.s32.totalorder %s17, 4
      %s27 = sphi 0, %s29
      %s30 = sphi 0, %s27
      %s31 = sphi 0, %s30
      %s47 = sphi 0, %s31
      %s53 = sphi 0, %s55
      %s56 = sphi 0, %s53
      %s57 = sphi 0, %s56
      %s73 = sphi 0, %s57
      %s77 = sphi 0, %s77
      %s79 = sphi 0, %s77
      %s80 = sphi 0, %s79
      %s94 = sphi 0, %s80
      %s98 = sphi 0, %s98
      %s100 = sphi 0, %s98
      %s101 = sphi 0, %s100
      %s115 = sphi 0, %s101
      %s119 = sphi 0, %s119
      %s121 = sphi 0, %s119
      %s122 = sphi 0, %s121
      %s136 = sphi 0, %s122
      %s140 = sphi 0, %s140
      %s142 = sphi 0, %s140
      %s143 = sphi 0, %s142
      %s157 = sphi 0, %s143
      %s161 = sphi 0, %s161
      %s163 = sphi 0, %s161
      %s164 = sphi 0, %s163
      %s178 = sphi 0, %s164
      %s182 = sphi 0, %s182
      %s184 = sphi 0, %s182
      %s185 = sphi 0, %s184
      %s199 = sphi 0, %s185
      %s203 = sphi 0, %s203
      %s205 = sphi 0, %s203
      %s206 = sphi 0, %s205
      %s220 = sphi 0, %s206
      %s226 = sphi 0, %s228
      %s229 = sphi 0, %s226
      %s230 = sphi 0, %s229
      %s246 = sphi 0, %s230
    $region4: #{tpu_custom_call.1} parent=1 // loop_header_branch
      %20 = sbr.rel (%p18) target = $region8
    $region5: #{tpu_custom_call.1} parent=1 // loop_body
      %s22 = ssub.s32 %s17, 1
      %s23 = ssub.s32 %s17, 2
      %s24 = sadd.s32 %s17, 1
      %s25 = ssub.s32 %s17, %s24
      %p26 = scmp.eq.s32.totalorder %s25, 0
      %s28 = sadd.s32 %s27, 1
      %s29 = scalar_select %p26, %s27, %s28
      %p32 = pneg %p26
      %p33 = scmp.eq.s32.totalorder %s17, 1
      %p34 = por %p32, %p33
      %p35 = scmp.ne.s32.totalorder %s27, %s30
      %p36 = scmp.eq.s32.totalorder %s17, 0
      %p37 = por %p35, %p36
      %p38 = scmp.ne.s32.totalorder %s27, %s30
      %p39 = scmp.eq.s32.totalorder %s22, 1
      %p40 = por %p38, %p39
      %p41 = scmp.ne.s32.totalorder %s30, %s31
      %p42 = scmp.eq.s32.totalorder %s22, 0
      %p43 = por %p41, %p42
      %p44 = scmp.ne.s32.totalorder %s30, %s31
      %p45 = scmp.eq.s32.totalorder %s23, 1
      %p46 = por %p44, %p45
      %p48 = scmp.ne.s32.totalorder %s31, %s47
      %p49 = scmp.eq.s32.totalorder %s23, 0
      %p50 = por %p48, %p49
      %s51 = ssub.s32 %s17, %s24
      %p52 = scmp.eq.s32.totalorder %s51, 0
      %s54 = sadd.s32 %s53, 1
      %s55 = scalar_select %p52, %s53, %s54
      %p58 = pneg %p52
      %p59 = scmp.eq.s32.totalorder %s17, 1
      %p60 = por %p58, %p59
      %p61 = scmp.ne.s32.totalorder %s53, %s56
      %p62 = scmp.eq.s32.totalorder %s17, 0
      %p63 = por %p61, %p62
      %p64 = scmp.ne.s32.totalorder %s53, %s56
      %p65 = scmp.eq.s32.totalorder %s22, 1
      %p66 = por %p64, %p65
      %p67 = scmp.ne.s32.totalorder %s56, %s57
      %p68 = scmp.eq.s32.totalorder %s22, 0
      %p69 = por %p67, %p68
      %p70 = scmp.ne.s32.totalorder %s56, %s57
      %p71 = scmp.eq.s32.totalorder %s23, 1
      %p72 = por %p70, %p71
      %p74 = scmp.ne.s32.totalorder %s57, %s73
      %p75 = scmp.eq.s32.totalorder %s23, 0
      %p76 = por %p74, %p75
      %s78 = sadd.s32 %s77, 1
      %p81 = scmp.eq.s32.totalorder %s17, 1
      %p82 = scmp.ne.s32.totalorder %s77, %s79
      %p83 = scmp.eq.s32.totalorder %s17, 0
      %p84 = por %p82, %p83
      %p85 = scmp.ne.s32.totalorder %s77, %s79
      %p86 = scmp.eq.s32.totalorder %s22, 1
      %p87 = por %p85, %p86
      %p88 = scmp.ne.s32.totalorder %s79, %s80
      %p89 = scmp.eq.s32.totalorder %s22, 0
      %p90 = por %p88, %p89
      %p91 = scmp.ne.s32.totalorder %s79, %s80
      %p92 = scmp.eq.s32.totalorder %s23, 1
      %p93 = por %p91, %p92
      %p95 = scmp.ne.s32.totalorder %s80, %s94
      %p96 = scmp.eq.s32.totalorder %s23, 0
      %p97 = por %p95, %p96
      %s99 = sadd.s32 %s98, 1
      %p102 = scmp.eq.s32.totalorder %s17, 1
      %p103 = scmp.ne.s32.totalorder %s98, %s100
      %p104 = scmp.eq.s32.totalorder %s17, 0
      %p105 = por %p103, %p104
      %p106 = scmp.ne.s32.totalorder %s98, %s100
      %p107 = scmp.eq.s32.totalorder %s22, 1
      %p108 = por %p106, %p107
      %p109 = scmp.ne.s32.totalorder %s100, %s101
      %p110 = scmp.eq.s32.totalorder %s22, 0
      %p111 = por %p109, %p110
      %p112 = scmp.ne.s32.totalorder %s100, %s101
      %p113 = scmp.eq.s32.totalorder %s23, 1
      %p114 = por %p112, %p113
      %p116 = scmp.ne.s32.totalorder %s101, %s115
      %p117 = scmp.eq.s32.totalorder %s23, 0
      %p118 = por %p116, %p117
      %s120 = sadd.s32 %s119, 1
      %p123 = scmp.eq.s32.totalorder %s17, 1
      %p124 = scmp.ne.s32.totalorder %s119, %s121
      %p125 = scmp.eq.s32.totalorder %s17, 0
      %p126 = por %p124, %p125
      %p127 = scmp.ne.s32.totalorder %s119, %s121
      %p128 = scmp.eq.s32.totalorder %s22, 1
      %p129 = por %p127, %p128
      %p130 = scmp.ne.s32.totalorder %s121, %s122
      %p131 = scmp.eq.s32.totalorder %s22, 0
      %p132 = por %p130, %p131
      %p133 = scmp.ne.s32.totalorder %s121, %s122
      %p134 = scmp.eq.s32.totalorder %s23, 1
      %p135 = por %p133, %p134
      %p137 = scmp.ne.s32.totalorder %s122, %s136
      %p138 = scmp.eq.s32.totalorder %s23, 0
      %p139 = por %p137, %p138
      %s141 = sadd.s32 %s140, 1
      %p144 = scmp.eq.s32.totalorder %s17, 1
      %p145 = scmp.ne.s32.totalorder %s140, %s142
      %p146 = scmp.eq.s32.totalorder %s17, 0
      %p147 = por %p145, %p146
      %p148 = scmp.ne.s32.totalorder %s140, %s142
      %p149 = scmp.eq.s32.totalorder %s22, 1
      %p150 = por %p148, %p149
      %p151 = scmp.ne.s32.totalorder %s142, %s143
      %p152 = scmp.eq.s32.totalorder %s22, 0
      %p153 = por %p151, %p152
      %p154 = scmp.ne.s32.totalorder %s142, %s143
      %p155 = scmp.eq.s32.totalorder %s23, 1
      %p156 = por %p154, %p155
      %p158 = scmp.ne.s32.totalorder %s143, %s157
      %p159 = scmp.eq.s32.totalorder %s23, 0
      %p160 = por %p158, %p159
      %s162 = sadd.s32 %s161, 1
      %p165 = scmp.eq.s32.totalorder %s17, 1
      %p166 = scmp.ne.s32.totalorder %s161, %s163
      %p167 = scmp.eq.s32.totalorder %s17, 0
      %p168 = por %p166, %p167
      %p169 = scmp.ne.s32.totalorder %s161, %s163
      %p170 = scmp.eq.s32.totalorder %s22, 1
      %p171 = por %p169, %p170
      %p172 = scmp.ne.s32.totalorder %s163, %s164
      %p173 = scmp.eq.s32.totalorder %s22, 0
      %p174 = por %p172, %p173
      %p175 = scmp.ne.s32.totalorder %s163, %s164
      %p176 = scmp.eq.s32.totalorder %s23, 1
      %p177 = por %p175, %p176
      %p179 = scmp.ne.s32.totalorder %s164, %s178
      %p180 = scmp.eq.s32.totalorder %s23, 0
      %p181 = por %p179, %p180
      %s183 = sadd.s32 %s182, 1
      %p186 = scmp.eq.s32.totalorder %s17, 1
      %p187 = scmp.ne.s32.totalorder %s182, %s184
      %p188 = scmp.eq.s32.totalorder %s17, 0
      %p189 = por %p187, %p188
      %p190 = scmp.ne.s32.totalorder %s182, %s184
      %p191 = scmp.eq.s32.totalorder %s22, 1
      %p192 = por %p190, %p191
      %p193 = scmp.ne.s32.totalorder %s184, %s185
      %p194 = scmp.eq.s32.totalorder %s22, 0
      %p195 = por %p193, %p194
      %p196 = scmp.ne.s32.totalorder %s184, %s185
      %p197 = scmp.eq.s32.totalorder %s23, 1
      %p198 = por %p196, %p197
      %p200 = scmp.ne.s32.totalorder %s185, %s199
      %p201 = scmp.eq.s32.totalorder %s23, 0
      %p202 = por %p200, %p201
      %s204 = sadd.s32 %s203, 1
      %p207 = scmp.eq.s32.totalorder %s17, 1
      %p208 = scmp.ne.s32.totalorder %s203, %s205
      %p209 = scmp.eq.s32.totalorder %s17, 0
      %p210 = por %p208, %p209
      %p211 = scmp.ne.s32.totalorder %s203, %s205
      %p212 = scmp.eq.s32.totalorder %s22, 1
      %p213 = por %p211, %p212
      %p214 = scmp.ne.s32.totalorder %s205, %s206
      %p215 = scmp.eq.s32.totalorder %s22, 0
      %p216 = por %p214, %p215
      %p217 = scmp.ne.s32.totalorder %s205, %s206
      %p218 = scmp.eq.s32.totalorder %s23, 1
      %p219 = por %p217, %p218
      %p221 = scmp.ne.s32.totalorder %s206, %s220
      %p222 = scmp.eq.s32.totalorder %s23, 0
      %p223 = por %p221, %p222
      %s224 = ssub.s32 %s17, %s24
      %p225 = scmp.eq.s32.totalorder %s224, 0
      %s227 = sadd.s32 %s226, 1
      %s228 = scalar_select %p225, %s226, %s227
      %p231 = pneg %p225
      %p232 = scmp.eq.s32.totalorder %s17, 1
      %p233 = por %p231, %p232
      %p234 = scmp.ne.s32.totalorder %s226, %s229
      %p235 = scmp.eq.s32.totalorder %s17, 0
      %p236 = por %p234, %p235
      %p237 = scmp.ne.s32.totalorder %s226, %s229
      %p238 = scmp.eq.s32.totalorder %s22, 1
      %p239 = por %p237, %p238
      %p240 = scmp.ne.s32.totalorder %s229, %s230
      %p241 = scmp.eq.s32.totalorder %s22, 0
      %p242 = por %p240, %p241
      %p243 = scmp.ne.s32.totalorder %s229, %s230
      %p244 = scmp.eq.s32.totalorder %s23, 1
      %p245 = por %p243, %p244
      %p247 = scmp.ne.s32.totalorder %s230, %s246
      %p248 = scmp.eq.s32.totalorder %s23, 0
      %p249 = por %p247, %p248
      %p250 = scmp.le.s32.totalorder 1, %s17
      %p251 = scmp.lt.s32.totalorder %s17, 3
      %p252 = pnand %p250, %p251
      %p253 = pneg %p252
      // Predicated region
      $region9: #{tpu_custom_call.1} parent=5 // pred_check
        _
      $region10: #{tpu_custom_call.1} parent=5 // pred_check_branch
        %255 = sbr.rel (%p252) target = $region12
      $region11: #{tpu_custom_call.1} parent=5 // pred_region
        %s256 = ssub.s32 %s17, 1
        // Predicated region
        $region13: #{tpu_custom_call.1} parent=11 // pred_check
          %p257 = pneg %p90
        $region14: #{tpu_custom_call.1} parent=11 // pred_check_branch
          %259 = sbr.rel (%p257) target = $region16
        $region15: #{tpu_custom_call.1} parent=11 // pred_region
          %s261 = ssub.s32 256, 256
          %262 = vsyncadd [#allocation3], %s261
          %s263 = sshll.u32 [#allocation2], 4
          %s264 = int_to_ptr.vmem [resolvable:$true] %s263
          %269 = dma.hbm_to_vmem [thread:$0]  %s2, 256, %s264, [#allocation3], 64, 64, 4
        $region16: #{tpu_custom_call.1} parent=11 // pred_fallthru
          _
        // Predicated region
        $region17: #{tpu_custom_call.1} parent=11 // pred_check
          %p270 = pneg %p111
        $region18: #{tpu_custom_call.1} parent=11 // pred_check_branch
          %272 = sbr.rel (%p270) target = $region20
        $region19: #{tpu_custom_call.1} parent=11 // pred_region
          %s274 = ssub.s32 3584, 3584
          %275 = vsyncadd [#allocation5], %s274
          %s276 = sshll.u32 [#allocation4], 4
          %s277 = int_to_ptr.vmem [resolvable:$true] %s276
          %282 = dma.hbm_to_vmem [thread:$0]  %s3, 3584, %s277, [#allocation5], 64, 64, 4
        $region20: #{tpu_custom_call.1} parent=11 // pred_fallthru
          _
        // Predicated region
        $region21: #{tpu_custom_call.1} parent=11 // pred_check
          %p283 = pneg %p132
        $region22: #{tpu_custom_call.1} parent=11 // pred_check_branch
          %285 = sbr.rel (%p283) target = $region24
        $region23: #{tpu_custom_call.1} parent=11 // pred_region
          %s287 = ssub.s32 256, 256
          %288 = vsyncadd [#allocation5], %s287
          %s289 = sshll.u32 [#allocation6], 4
          %s290 = int_to_ptr.vmem [resolvable:$true] %s289
          %295 = dma.hbm_to_vmem [thread:$0]  %s4, 256, %s290, [#allocation5], 128, 128, 8
        $region24: #{tpu_custom_call.1} parent=11 // pred_fallthru
          _
        // Predicated region
        $region25: #{tpu_custom_call.1} parent=11 // pred_check
          %p296 = pneg %p153
        $region26: #{tpu_custom_call.1} parent=11 // pred_check_branch
          %298 = sbr.rel (%p296) target = $region28
        $region27: #{tpu_custom_call.1} parent=11 // pred_region
          _
        $region28: #{tpu_custom_call.1} parent=11 // pred_fallthru
          _
        // Predicated region
        $region29: #{tpu_custom_call.1} parent=11 // pred_check
          %p299 = pneg %p174
        $region30: #{tpu_custom_call.1} parent=11 // pred_check_branch
          %301 = sbr.rel (%p299) target = $region32
        $region31: #{tpu_custom_call.1} parent=11 // pred_region
          _
        $region32: #{tpu_custom_call.1} parent=11 // pred_fallthru
          _
        // Predicated region
        $region33: #{tpu_custom_call.1} parent=11 // pred_check
          %p302 = pneg %p195
        $region34: #{tpu_custom_call.1} parent=11 // pred_check_branch
          %304 = sbr.rel (%p302) target = $region36
        $region35: #{tpu_custom_call.1} parent=11 // pred_region
          _
        $region36: #{tpu_custom_call.1} parent=11 // pred_fallthru
          _
        // Predicated region
        $region37: #{tpu_custom_call.1} parent=11 // pred_check
          %p305 = pneg %p216
        $region38: #{tpu_custom_call.1} parent=11 // pred_check_branch
          %307 = sbr.rel (%p305) target = $region40
        $region39: #{tpu_custom_call.1} parent=11 // pred_region
          _
        $region40: #{tpu_custom_call.1} parent=11 // pred_fallthru
          _
      $region12: #{tpu_custom_call.1} parent=5 // pred_fallthru
        _
      %p308 = scmp.lt.s32.totalorder %s17, 2
      // Predicated region
      $region41: #{tpu_custom_call.1} parent=5 // pred_check
        %p309 = pneg %p308
      $region42: #{tpu_custom_call.1} parent=5 // pred_check_branch
        %311 = sbr.rel (%p309) target = $region44
      $region43: #{tpu_custom_call.1} parent=5 // pred_region
        // Predicated region
        $region45: #{tpu_custom_call.1} parent=43 // pred_check
          %p312 = pneg %p37
        $region46: #{tpu_custom_call.1} parent=43 // pred_check_branch
          %314 = sbr.rel (%p312) target = $region48
        $region47: #{tpu_custom_call.1} parent=43 // pred_region
          %p315 = scmp.lt.s32.totalorder %s17, 1
          %s316 = scalar_select %p315, %s17, 1
          %s317 = smul.addr %s316, 4
          %s318 = scalar_lea.vmem %s0, %s317
        $region48: #{tpu_custom_call.1} parent=43 // pred_fallthru
          _
        // Predicated region
        $region49: #{tpu_custom_call.1} parent=43 // pred_check
          %p319 = pneg %p63
        $region50: #{tpu_custom_call.1} parent=43 // pred_check_branch
          %321 = sbr.rel (%p319) target = $region52
        $region51: #{tpu_custom_call.1} parent=43 // pred_region
          %p322 = scmp.lt.s32.totalorder %s17, 1
          %s323 = scalar_select %p322, %s17, 1
          %s324 = smul.addr %s323, 8
          %s325 = scalar_lea.vmem %s1, %s324
        $region52: #{tpu_custom_call.1} parent=43 // pred_fallthru
          _
      $region44: #{tpu_custom_call.1} parent=5 // pred_fallthru
        _
      %p326 = scmp.le.s32.totalorder 1, %s17
      %p327 = scmp.lt.s32.totalorder %s17, 3
      %p328 = pnand %p326, %p327
      %p329 = pneg %p328
      // Predicated region
      $region53: #{tpu_custom_call.1} parent=5 // pred_check
        _
      $region54: #{tpu_custom_call.1} parent=5 // pred_check_branch
        %331 = sbr.rel (%p328) target = $region56
      $region55: #{tpu_custom_call.1} parent=5 // pred_region
        %s332 = ssub.s32 %s17, 1
        // Predicated region
        $region57: #{tpu_custom_call.1} parent=55 // pred_check
          %p333 = pneg %p90
        $region58: #{tpu_custom_call.1} parent=55 // pred_check_branch
          %335 = sbr.rel (%p333) target = $region60
        $region59: #{tpu_custom_call.1} parent=55 // pred_region
          %336 = dma.done [#allocation3], 256
        $region60: #{tpu_custom_call.1} parent=55 // pred_fallthru
          _
        // Predicated region
        $region61: #{tpu_custom_call.1} parent=55 // pred_check
          %p337 = pneg %p111
        $region62: #{tpu_custom_call.1} parent=55 // pred_check_branch
          %339 = sbr.rel (%p337) target = $region64
        $region63: #{tpu_custom_call.1} parent=55 // pred_region
          %340 = dma.done [#allocation5], 3584
        $region64: #{tpu_custom_call.1} parent=55 // pred_fallthru
          _
        // Predicated region
        $region65: #{tpu_custom_call.1} parent=55 // pred_check
          %p341 = pneg %p132
        $region66: #{tpu_custom_call.1} parent=55 // pred_check_branch
          %343 = sbr.rel (%p341) target = $region68
        $region67: #{tpu_custom_call.1} parent=55 // pred_region
          %344 = dma.done [#allocation5], 256
        $region68: #{tpu_custom_call.1} parent=55 // pred_fallthru
          _
        %p345 = scmp.lt.s32.totalorder %s22, 1
        %s346 = scalar_select %p345, %s22, 1
        %s347 = smul.addr %s346, 4
        %s348 = scalar_lea.vmem %s0, %s347
        %p349 = pneg %p43
        %p350 = pneg %p40
        %p351 = scmp.lt.s32.totalorder %s22, 1
        %s352 = scalar_select %p351, %s22, 1
        %s353 = smul.addr %s352, 8
        %s354 = scalar_lea.vmem %s1, %s353
        %p355 = pneg %p69
        %p356 = pneg %p66
        %p357 = pneg %p90
        %p358 = pneg %p87
        %p359 = pneg %p111
        %p360 = pneg %p108
        %p361 = pneg %p132
        %p362 = pneg %p129
        %p363 = pneg %p153
        %p364 = pneg %p150
        %p365 = pneg %p174
        %p366 = pneg %p171
        %p367 = pneg %p195
        %p368 = pneg %p192
        %p369 = pneg %p216
        %p370 = pneg %p213
        %p371 = pneg %p242
        %p372 = pneg %p239
        %p373 = scmp.lt.s32.totalorder %s22, 1
        %s374 = scalar_select %p373, %s22, 1
        %s375 = smul.addr %s374, 8
        %s376 = scalar_lea.vmem %s9, %s375
        %p377 = scmp.lt.s32.totalorder %s22, 1
        %s378 = scalar_select %p377, %s22, 1
        %s379 = smul.addr %s378, 4
        %s380 = scalar_lea.vmem %s0, %s379
        %p381 = scmp.lt.s32.totalorder %s22, 1
        %s382 = scalar_select %p381, %s22, 1
        %s383 = smul.addr %s382, 8
        %s384 = scalar_lea.vmem %s1, %s383
        %p385 = scmp.lt.s32.totalorder %s22, 1
        %s386 = scalar_select %p385, %s22, 1
        %s387 = smul.addr %s386, 8
        %s388 = scalar_lea.vmem %s9, %s387
        %v390 = vld [vmem:[%s380] sm:$0xf]
        %v391 = vld [vmem:[#allocation2] sm:$0xf]
        %v392 = vld [vmem:[#allocation2 + $0x4] sm:$0xf]
        %v393 = vld [vmem:[#allocation2 + $0x8] sm:$0xf]
        %v394 = vld [vmem:[#allocation2 + $0xc] sm:$0x3]
        %v399 = vunpack.c.l.b16 %v391
        %v400 = vunpack.c.l.b16 %v392
        %v401 = vunpack.c.l.b16 %v393
        %v402 = vunpack.c.l.b16 %v394
        %v403 = vpack.c.b16 %v400, %v399
        %v404 = vpack.c.b16 %v402, %v401
        %vm406 = vcmask 220160
        %v408 = vsel %vm406, %v390, 0
        %vm410 = vcmask 1044480
        %vm411 = vcmask 1045504
        %v412 = vsel %vm410, 4294967295, 65535
        %v413 = vsel %vm411, %v412, 0
        %v415 = vand.u32 %v404, %v413
        %417 = vmatprep.subr.bf16.mxu0 0
        %418 = vmatpush1.bf16.msra.mxu0 0
        %419 = vmatprep.subr.bf16.mxu0 0
        %420 = vmatpush1.bf16.msra.mxu0 0
        %421 = vmatprep.subr.bf16.mxu0 0
        %422 = vmatpush1.bf16.msra.mxu0 0
        %423 = vmatprep.subr.bf16.mxu0 0
        %424 = vmatpush1.bf16.msra.mxu0 0
        %425 = vmatprep.subr.bf16.mxu0 0
        %426 = vmatpush1.bf16.msra.mxu0 0
        %427 = vmatprep.subr.bf16.mxu0 0
        %428 = vmatpush1.bf16.msra.mxu0 0
        %429 = vmatprep.subr.bf16.mxu0 0
        %430 = vmatpush1.bf16.msra.mxu0 %v415
        %431 = vmatprep.subr.bf16.mxu0 0
        %432 = vmatpush1.bf16.msra.mxu0 %v403
        %433 = vmatprep.subr.bf16.mxu0 0
        %434 = vmatpush2.bf16.msra.mxu0 0
        %435 = vmatprep.subr.bf16.mxu0 0
        %436 = vmatpush2.bf16.msra.mxu0 0
        %437 = vmatprep.subr.bf16.mxu0 0
        %438 = vmatpush2.bf16.msra.mxu0 0
        %439 = vmatprep.subr.bf16.mxu0 0
        %440 = vmatpush2.bf16.msra.mxu0 0
        %441 = vmatprep.subr.bf16.mxu0 0
        %442 = vmatpush2.bf16.msra.mxu0 0
        %443 = vmatprep.subr.bf16.mxu0 0
        %444 = vmatpush2.bf16.msra.mxu0 0
        %445 = vmatprep.subr.bf16.mxu0 0
        %446 = vmatpush2.bf16.msra.mxu0 0
        %447 = vmatprep.subr.bf16.mxu0 0
        %448 = vmatpush2.bf16.msra.mxu0 0
        %449 = vmatprep.mubr.bf16.mxu0 0
        %450 = vmatmul.mubr.bf16.gmra.mxu0 %v408
        %v451 = vpop.f32.mrf.mxu0
        %v452 = vadd.f32 0.0, %v451
        %v453 = vpop.f32.mrf.mxu0
        %v454 = vpop.f32.mrf.mxu0
        %v455 = vpop.f32.mrf.mxu0
        %456 = vdwg.mxu0
        %v457 = vld [vmem:[#allocation6] sm:$0x1]
        %v458 = vlaneseq
        %v459 = vshrl.u32 %v458, 7
        %v460 = vsub.s32 0, %v459
        %v461 = vrot.slane %v457, %v460
        %v462 = vadd.f32 %v452, %v461
        %v463 = vmax.f32 %v462, 0.0
        %v464 = vpack.c.bf16 %v463, %v463
        %v465 = vld [vmem:[#allocation4] sm:$0xf]
        %v466 = vld [vmem:[#allocation4 + $0x4] sm:$0xf]
        %v467 = vld [vmem:[#allocation4 + $0x8] sm:$0xf]
        %v468 = vld [vmem:[#allocation4 + $0xc] sm:$0xf]
        %v469 = vld [vmem:[#allocation4 + $0x10] sm:$0xf]
        %v470 = vld [vmem:[#allocation4 + $0x14] sm:$0xf]
        %v471 = vld [vmem:[#allocation4 + $0x18] sm:$0xf]
        %v472 = vld [vmem:[#allocation4 + $0x1c] sm:$0xf]
        %v473 = vld [vmem:[#allocation6 + $0x1] sm:$0x1]
        %v474 = vlaneseq
        %v475 = vshrl.u32 %v474, 7
        %v476 = vsub.s32 0, %v475
        %v477 = vrot.slane %v473, %v476
        %v486 = vunpack.c.l.b16 %v465
        %v487 = vunpack.c.l.b16 %v466
        %v488 = vunpack.c.l.b16 %v467
        %v489 = vunpack.c.l.b16 %v468
        %v490 = vunpack.c.l.b16 %v469
        %v491 = vunpack.c.l.b16 %v470
        %v492 = vunpack.c.l.b16 %v471
        %v493 = vunpack.c.l.b16 %v472
        %v494 = vpack.c.b16 %v487, %v486
        %v495 = vpack.c.b16 %v489, %v488
        %v496 = vpack.c.b16 %v491, %v490
        %v497 = vpack.c.b16 %v493, %v492
        %vm502 = vcmask 523264
        %v504 = vsel %vm502, %v464, 0
        %506 = vmatprep.subr.bf16.mxu0 0
        %507 = vmatpush1.bf16.msra.mxu0 0
        %508 = vmatprep.subr.bf16.mxu0 0
        %509 = vmatpush1.bf16.msra.mxu0 0
        %510 = vmatprep.subr.bf16.mxu0 0
        %511 = vmatpush1.bf16.msra.mxu0 0
        %512 = vmatprep.subr.bf16.mxu0 0
        %513 = vmatpush1.bf16.msra.mxu0 0
        %514 = vmatprep.subr.bf16.mxu0 0
        %515 = vmatpush1.bf16.msra.mxu0 %v497
        %516 = vmatprep.subr.bf16.mxu0 0
        %517 = vmatpush1.bf16.msra.mxu0 %v496
        %518 = vmatprep.subr.bf16.mxu0 0
        %519 = vmatpush1.bf16.msra.mxu0 %v495
        %520 = vmatprep.subr.bf16.mxu0 0
        %521 = vmatpush1.bf16.msra.mxu0 %v494
        %522 = vmatprep.subr.bf16.mxu0 0
        %523 = vmatpush2.bf16.msra.mxu0 0
        %524 = vmatprep.subr.bf16.mxu0 0
        %525 = vmatpush2.bf16.msra.mxu0 0
        %526 = vmatprep.subr.bf16.mxu0 0
        %527 = vmatpush2.bf16.msra.mxu0 0
        %528 = vmatprep.subr.bf16.mxu0 0
        %529 = vmatpush2.bf16.msra.mxu0 0
        %530 = vmatprep.subr.bf16.mxu0 0
        %531 = vmatpush2.bf16.msra.mxu0 0
        %532 = vmatprep.subr.bf16.mxu0 0
        %533 = vmatpush2.bf16.msra.mxu0 0
        %534 = vmatprep.subr.bf16.mxu0 0
        %535 = vmatpush2.bf16.msra.mxu0 0
        %536 = vmatprep.subr.bf16.mxu0 0
        %537 = vmatpush2.bf16.msra.mxu0 0
        %538 = vmatprep.mubr.bf16.mxu0 0
        %539 = vmatmul.mubr.bf16.gmra.mxu0 %v504
        %v540 = vpop.f32.mrf.mxu0
        %v541 = vadd.f32 %v477, %v540
        %v542 = vpop.f32.mrf.mxu0
        %v543 = vpop.f32.mrf.mxu0
        %v544 = vpop.f32.mrf.mxu0
        %545 = vdwg.mxu0
        %v546 = vmax.f32 %v541, 0.0
        %v547 = vpack.c.bf16 %v546, %v546
        %s548 = scalar_lea.vmem [#allocation4], 32
        %v549 = vld [vmem:[%s548] sm:$0xf]
        %v550 = vld [vmem:[%s548 + $0x4] sm:$0xf]
        %v551 = vld [vmem:[%s548 + $0x8] sm:$0xf]
        %v552 = vld [vmem:[%s548 + $0xc] sm:$0xf]
        %v553 = vld [vmem:[%s548 + $0x10] sm:$0xf]
        %v554 = vld [vmem:[%s548 + $0x14] sm:$0xf]
        %v555 = vld [vmem:[%s548 + $0x18] sm:$0xf]
        %v556 = vld [vmem:[%s548 + $0x1c] sm:$0xf]
        %v557 = vld [vmem:[#allocation6 + $0x2] sm:$0x1]
        %v558 = vlaneseq
        %v559 = vshrl.u32 %v558, 7
        %v560 = vsub.s32 0, %v559
        %v561 = vrot.slane %v557, %v560
        %v570 = vunpack.c.l.b16 %v549
        %v571 = vunpack.c.l.b16 %v550
        %v572 = vunpack.c.l.b16 %v551
        %v573 = vunpack.c.l.b16 %v552
        %v574 = vunpack.c.l.b16 %v553
        %v575 = vunpack.c.l.b16 %v554
        %v576 = vunpack.c.l.b16 %v555
        %v577 = vunpack.c.l.b16 %v556
        %v578 = vpack.c.b16 %v571, %v570
        %v579 = vpack.c.b16 %v573, %v572
        %v580 = vpack.c.b16 %v575, %v574
        %v581 = vpack.c.b16 %v577, %v576
        %v587 = vsel %vm502, %v547, 0
        %589 = vmatprep.subr.bf16.mxu0 0
        %590 = vmatpush1.bf16.msra.mxu0 0
        %591 = vmatprep.subr.bf16.mxu0 0
        %592 = vmatpush1.bf16.msra.mxu0 0
        %593 = vmatprep.subr.bf16.mxu0 0
        %594 = vmatpush1.bf16.msra.mxu0 0
        %595 = vmatprep.subr.bf16.mxu0 0
        %596 = vmatpush1.bf16.msra.mxu0 0
        %597 = vmatprep.subr.bf16.mxu0 0
        %598 = vmatpush1.bf16.msra.mxu0 %v581
        %599 = vmatprep.subr.bf16.mxu0 0
        %600 = vmatpush1.bf16.msra.mxu0 %v580
        %601 = vmatprep.subr.bf16.mxu0 0
        %602 = vmatpush1.bf16.msra.mxu0 %v579
        %603 = vmatprep.subr.bf16.mxu0 0
        %604 = vmatpush1.bf16.msra.mxu0 %v578
        %605 = vmatprep.subr.bf16.mxu0 0
        %606 = vmatpush2.bf16.msra.mxu0 0
        %607 = vmatprep.subr.bf16.mxu0 0
        %608 = vmatpush2.bf16.msra.mxu0 0
        %609 = vmatprep.subr.bf16.mxu0 0
        %610 = vmatpush2.bf16.msra.mxu0 0
        %611 = vmatprep.subr.bf16.mxu0 0
        %612 = vmatpush2.bf16.msra.mxu0 0
        %613 = vmatprep.subr.bf16.mxu0 0
        %614 = vmatpush2.bf16.msra.mxu0 0
        %615 = vmatprep.subr.bf16.mxu0 0
        %616 = vmatpush2.bf16.msra.mxu0 0
        %617 = vmatprep.subr.bf16.mxu0 0
        %618 = vmatpush2.bf16.msra.mxu0 0
        %619 = vmatprep.subr.bf16.mxu0 0
        %620 = vmatpush2.bf16.msra.mxu0 0
        %621 = vmatprep.mubr.bf16.mxu0 0
        %622 = vmatmul.mubr.bf16.gmra.mxu0 %v587
        %v623 = vpop.f32.mrf.mxu0
        %v624 = vadd.f32 %v561, %v623
        %v625 = vpop.f32.mrf.mxu0
        %v626 = vpop.f32.mrf.mxu0
        %v627 = vpop.f32.mrf.mxu0
        %628 = vdwg.mxu0
        %v629 = vmax.f32 %v624, 0.0
        %v630 = vpack.c.bf16 %v629, %v629
        %s631 = scalar_lea.vmem [#allocation4], 64
        %v632 = vld [vmem:[%s631] sm:$0xf]
        %v633 = vld [vmem:[%s631 + $0x4] sm:$0xf]
        %v634 = vld [vmem:[%s631 + $0x8] sm:$0xf]
        %v635 = vld [vmem:[%s631 + $0xc] sm:$0xf]
        %v636 = vld [vmem:[%s631 + $0x10] sm:$0xf]
        %v637 = vld [vmem:[%s631 + $0x14] sm:$0xf]
        %v638 = vld [vmem:[%s631 + $0x18] sm:$0xf]
        %v639 = vld [vmem:[%s631 + $0x1c] sm:$0xf]
        %v640 = vld [vmem:[#allocation6 + $0x3] sm:$0x1]
        %v641 = vlaneseq
        %v642 = vshrl.u32 %v641, 7
        %v643 = vsub.s32 0, %v642
        %v644 = vrot.slane %v640, %v643
        %v653 = vunpack.c.l.b16 %v632
        %v654 = vunpack.c.l.b16 %v633
        %v655 = vunpack.c.l.b16 %v634
        %v656 = vunpack.c.l.b16 %v635
        %v657 = vunpack.c.l.b16 %v636
        %v658 = vunpack.c.l.b16 %v637
        %v659 = vunpack.c.l.b16 %v638
        %v660 = vunpack.c.l.b16 %v639
        %v661 = vpack.c.b16 %v654, %v653
        %v662 = vpack.c.b16 %v656, %v655
        %v663 = vpack.c.b16 %v658, %v657
        %v664 = vpack.c.b16 %v660, %v659
        %v670 = vsel %vm502, %v630, 0
        %672 = vmatprep.subr.bf16.mxu0 0
        %673 = vmatpush1.bf16.msra.mxu0 0
        %674 = vmatprep.subr.bf16.mxu0 0
        %675 = vmatpush1.bf16.msra.mxu0 0
        %676 = vmatprep.subr.bf16.mxu0 0
        %677 = vmatpush1.bf16.msra.mxu0 0
        %678 = vmatprep.subr.bf16.mxu0 0
        %679 = vmatpush1.bf16.msra.mxu0 0
        %680 = vmatprep.subr.bf16.mxu0 0
        %681 = vmatpush1.bf16.msra.mxu0 %v664
        %682 = vmatprep.subr.bf16.mxu0 0
        %683 = vmatpush1.bf16.msra.mxu0 %v663
        %684 = vmatprep.subr.bf16.mxu0 0
        %685 = vmatpush1.bf16.msra.mxu0 %v662
        %686 = vmatprep.subr.bf16.mxu0 0
        %687 = vmatpush1.bf16.msra.mxu0 %v661
        %688 = vmatprep.subr.bf16.mxu0 0
        %689 = vmatpush2.bf16.msra.mxu0 0
        %690 = vmatprep.subr.bf16.mxu0 0
        %691 = vmatpush2.bf16.msra.mxu0 0
        %692 = vmatprep.subr.bf16.mxu0 0
        %693 = vmatpush2.bf16.msra.mxu0 0
        %694 = vmatprep.subr.bf16.mxu0 0
        %695 = vmatpush2.bf16.msra.mxu0 0
        %696 = vmatprep.subr.bf16.mxu0 0
        %697 = vmatpush2.bf16.msra.mxu0 0
        %698 = vmatprep.subr.bf16.mxu0 0
        %699 = vmatpush2.bf16.msra.mxu0 0
        %700 = vmatprep.subr.bf16.mxu0 0
        %701 = vmatpush2.bf16.msra.mxu0 0
        %702 = vmatprep.subr.bf16.mxu0 0
        %703 = vmatpush2.bf16.msra.mxu0 0
        %704 = vmatprep.mubr.bf16.mxu0 0
        %705 = vmatmul.mubr.bf16.gmra.mxu0 %v670
        %v706 = vpop.f32.mrf.mxu0
        %v707 = vadd.f32 %v644, %v706
        %v708 = vpop.f32.mrf.mxu0
        %v709 = vpop.f32.mrf.mxu0
        %v710 = vpop.f32.mrf.mxu0
        %711 = vdwg.mxu0
        %v712 = vmax.f32 %v707, 0.0
        %v713 = vpack.c.bf16 %v712, %v712
        %s714 = scalar_lea.vmem [#allocation4], 96
        %v715 = vld [vmem:[%s714] sm:$0xf]
        %v716 = vld [vmem:[%s714 + $0x4] sm:$0xf]
        %v717 = vld [vmem:[%s714 + $0x8] sm:$0xf]
        %v718 = vld [vmem:[%s714 + $0xc] sm:$0xf]
        %v719 = vld [vmem:[%s714 + $0x10] sm:$0xf]
        %v720 = vld [vmem:[%s714 + $0x14] sm:$0xf]
        %v721 = vld [vmem:[%s714 + $0x18] sm:$0xf]
        %v722 = vld [vmem:[%s714 + $0x1c] sm:$0xf]
        %v723 = vld [vmem:[#allocation6 + $0x4] sm:$0x1]
        %v724 = vlaneseq
        %v725 = vshrl.u32 %v724, 7
        %v726 = vsub.s32 0, %v725
        %v727 = vrot.slane %v723, %v726
        %v736 = vunpack.c.l.b16 %v715
        %v737 = vunpack.c.l.b16 %v716
        %v738 = vunpack.c.l.b16 %v717
        %v739 = vunpack.c.l.b16 %v718
        %v740 = vunpack.c.l.b16 %v719
        %v741 = vunpack.c.l.b16 %v720
        %v742 = vunpack.c.l.b16 %v721
        %v743 = vunpack.c.l.b16 %v722
        %v744 = vpack.c.b16 %v737, %v736
        %v745 = vpack.c.b16 %v739, %v738
        %v746 = vpack.c.b16 %v741, %v740
        %v747 = vpack.c.b16 %v743, %v742
        %v753 = vsel %vm502, %v713, 0
        %755 = vmatprep.subr.bf16.mxu0 0
        %756 = vmatpush1.bf16.msra.mxu0 0
        %757 = vmatprep.subr.bf16.mxu0 0
        %758 = vmatpush1.bf16.msra.mxu0 0
        %759 = vmatprep.subr.bf16.mxu0 0
        %760 = vmatpush1.bf16.msra.mxu0 0
        %761 = vmatprep.subr.bf16.mxu0 0
        %762 = vmatpush1.bf16.msra.mxu0 0
        %763 = vmatprep.subr.bf16.mxu0 0
        %764 = vmatpush1.bf16.msra.mxu0 %v747
        %765 = vmatprep.subr.bf16.mxu0 0
        %766 = vmatpush1.bf16.msra.mxu0 %v746
        %767 = vmatprep.subr.bf16.mxu0 0
        %768 = vmatpush1.bf16.msra.mxu0 %v745
        %769 = vmatprep.subr.bf16.mxu0 0
        %770 = vmatpush1.bf16.msra.mxu0 %v744
        %771 = vmatprep.subr.bf16.mxu0 0
        %772 = vmatpush2.bf16.msra.mxu0 0
        %773 = vmatprep.subr.bf16.mxu0 0
        %774 = vmatpush2.bf16.msra.mxu0 0
        %775 = vmatprep.subr.bf16.mxu0 0
        %776 = vmatpush2.bf16.msra.mxu0 0
        %777 = vmatprep.subr.bf16.mxu0 0
        %778 = vmatpush2.bf16.msra.mxu0 0
        %779 = vmatprep.subr.bf16.mxu0 0
        %780 = vmatpush2.bf16.msra.mxu0 0
        %781 = vmatprep.subr.bf16.mxu0 0
        %782 = vmatpush2.bf16.msra.mxu0 0
        %783 = vmatprep.subr.bf16.mxu0 0
        %784 = vmatpush2.bf16.msra.mxu0 0
        %785 = vmatprep.subr.bf16.mxu0 0
        %786 = vmatpush2.bf16.msra.mxu0 0
        %787 = vmatprep.mubr.bf16.mxu0 0
        %788 = vmatmul.mubr.bf16.gmra.mxu0 %v753
        %v789 = vpop.f32.mrf.mxu0
        %v790 = vadd.f32 %v727, %v789
        %v791 = vpop.f32.mrf.mxu0
        %v792 = vpop.f32.mrf.mxu0
        %v793 = vpop.f32.mrf.mxu0
        %794 = vdwg.mxu0
        %v795 = vmax.f32 %v790, 0.0
        %v796 = vpack.c.bf16 %v795, %v795
        %s797 = scalar_lea.vmem [#allocation4], 128
        %v798 = vld [vmem:[%s797] sm:$0xf]
        %v799 = vld [vmem:[%s797 + $0x4] sm:$0xf]
        %v800 = vld [vmem:[%s797 + $0x8] sm:$0xf]
        %v801 = vld [vmem:[%s797 + $0xc] sm:$0xf]
        %v802 = vld [vmem:[%s797 + $0x10] sm:$0xf]
        %v803 = vld [vmem:[%s797 + $0x14] sm:$0xf]
        %v804 = vld [vmem:[%s797 + $0x18] sm:$0xf]
        %v805 = vld [vmem:[%s797 + $0x1c] sm:$0xf]
        %v814 = vunpack.c.l.b16 %v798
        %v815 = vunpack.c.l.b16 %v799
        %v816 = vunpack.c.l.b16 %v800
        %v817 = vunpack.c.l.b16 %v801
        %v818 = vunpack.c.l.b16 %v802
        %v819 = vunpack.c.l.b16 %v803
        %v820 = vunpack.c.l.b16 %v804
        %v821 = vunpack.c.l.b16 %v805
        %v822 = vpack.c.b16 %v815, %v814
        %v823 = vpack.c.b16 %v817, %v816
        %v824 = vpack.c.b16 %v819, %v818
        %v825 = vpack.c.b16 %v821, %v820
        %831 = vrot.lane.b32.xlu0 %v452, 64
        %v832 = vpop.permute.xlu0 %831
        %v835 = vsel %vm502, %v796, 0
        %837 = vmatprep.subr.bf16.mxu0 0
        %838 = vmatpush1.bf16.msra.mxu0 0
        %839 = vmatprep.subr.bf16.mxu0 0
        %840 = vmatpush1.bf16.msra.mxu0 0
        %841 = vmatprep.subr.bf16.mxu0 0
        %842 = vmatpush1.bf16.msra.mxu0 0
        %843 = vmatprep.subr.bf16.mxu0 0
        %844 = vmatpush1.bf16.msra.mxu0 0
        %845 = vmatprep.subr.bf16.mxu0 0
        %846 = vmatpush1.bf16.msra.mxu0 %v825
        %847 = vmatprep.subr.bf16.mxu0 0
        %848 = vmatpush1.bf16.msra.mxu0 %v824
        %849 = vmatprep.subr.bf16.mxu0 0
        %850 = vmatpush1.bf16.msra.mxu0 %v823
        %851 = vmatprep.subr.bf16.mxu0 0
        %852 = vmatpush1.bf16.msra.mxu0 %v822
        %853 = vmatprep.subr.bf16.mxu0 0
        %854 = vmatpush2.bf16.msra.mxu0 0
        %855 = vmatprep.subr.bf16.mxu0 0
        %856 = vmatpush2.bf16.msra.mxu0 0
        %857 = vmatprep.subr.bf16.mxu0 0
        %858 = vmatpush2.bf16.msra.mxu0 0
        %859 = vmatprep.subr.bf16.mxu0 0
        %860 = vmatpush2.bf16.msra.mxu0 0
        %861 = vmatprep.subr.bf16.mxu0 0
        %862 = vmatpush2.bf16.msra.mxu0 0
        %863 = vmatprep.subr.bf16.mxu0 0
        %864 = vmatpush2.bf16.msra.mxu0 0
        %865 = vmatprep.subr.bf16.mxu0 0
        %866 = vmatpush2.bf16.msra.mxu0 0
        %867 = vmatprep.subr.bf16.mxu0 0
        %868 = vmatpush2.bf16.msra.mxu0 0
        %869 = vmatprep.mubr.bf16.mxu0 0
        %870 = vmatmul.mubr.bf16.gmra.mxu0 %v835
        %v871 = vpop.f32.mrf.mxu0
        %v872 = vadd.f32 %v832, %v871
        %v873 = vpop.f32.mrf.mxu0
        %v874 = vpop.f32.mrf.mxu0
        %v875 = vpop.f32.mrf.mxu0
        %876 = vdwg.mxu0
        %v877 = vld [vmem:[#allocation6 + $0x5] sm:$0x1]
        %v878 = vlaneseq
        %v879 = vshrl.u32 %v878, 7
        %v880 = vsub.s32 0, %v879
        %v881 = vrot.slane %v877, %v880
        %v882 = vadd.f32 %v872, %v881
        %v883 = vmax.f32 %v882, 0.0
        %v884 = vpack.c.bf16 %v883, %v883
        %s885 = scalar_lea.vmem [#allocation4], 160
        %v886 = vld [vmem:[%s885] sm:$0xf]
        %v887 = vld [vmem:[%s885 + $0x4] sm:$0xf]
        %v888 = vld [vmem:[%s885 + $0x8] sm:$0xf]
        %v889 = vld [vmem:[%s885 + $0xc] sm:$0xf]
        %v890 = vld [vmem:[%s885 + $0x10] sm:$0xf]
        %v891 = vld [vmem:[%s885 + $0x14] sm:$0xf]
        %v892 = vld [vmem:[%s885 + $0x18] sm:$0xf]
        %v893 = vld [vmem:[%s885 + $0x1c] sm:$0xf]
        %v894 = vld [vmem:[#allocation6 + $0x6] sm:$0x1]
        %v895 = vlaneseq
        %v896 = vshrl.u32 %v895, 7
        %v897 = vsub.s32 0, %v896
        %v898 = vrot.slane %v894, %v897
        %v907 = vunpack.c.l.b16 %v886
        %v908 = vunpack.c.l.b16 %v887
        %v909 = vunpack.c.l.b16 %v888
        %v910 = vunpack.c.l.b16 %v889
        %v911 = vunpack.c.l.b16 %v890
        %v912 = vunpack.c.l.b16 %v891
        %v913 = vunpack.c.l.b16 %v892
        %v914 = vunpack.c.l.b16 %v893
        %v915 = vpack.c.b16 %v908, %v907
        %v916 = vpack.c.b16 %v910, %v909
        %v917 = vpack.c.b16 %v912, %v911
        %v918 = vpack.c.b16 %v914, %v913
        %v924 = vsel %vm502, %v884, 0
        %926 = vmatprep.subr.bf16.mxu0 0
        %927 = vmatpush1.bf16.msra.mxu0 0
        %928 = vmatprep.subr.bf16.mxu0 0
        %929 = vmatpush1.bf16.msra.mxu0 0
        %930 = vmatprep.subr.bf16.mxu0 0
        %931 = vmatpush1.bf16.msra.mxu0 0
        %932 = vmatprep.subr.bf16.mxu0 0
        %933 = vmatpush1.bf16.msra.mxu0 0
        %934 = vmatprep.subr.bf16.mxu0 0
        %935 = vmatpush1.bf16.msra.mxu0 %v918
        %936 = vmatprep.subr.bf16.mxu0 0
        %937 = vmatpush1.bf16.msra.mxu0 %v917
        %938 = vmatprep.subr.bf16.mxu0 0
        %939 = vmatpush1.bf16.msra.mxu0 %v916
        %940 = vmatprep.subr.bf16.mxu0 0
        %941 = vmatpush1.bf16.msra.mxu0 %v915
        %942 = vmatprep.subr.bf16.mxu0 0
        %943 = vmatpush2.bf16.msra.mxu0 0
        %944 = vmatprep.subr.bf16.mxu0 0
        %945 = vmatpush2.bf16.msra.mxu0 0
        %946 = vmatprep.subr.bf16.mxu0 0
        %947 = vmatpush2.bf16.msra.mxu0 0
        %948 = vmatprep.subr.bf16.mxu0 0
        %949 = vmatpush2.bf16.msra.mxu0 0
        %950 = vmatprep.subr.bf16.mxu0 0
        %951 = vmatpush2.bf16.msra.mxu0 0
        %952 = vmatprep.subr.bf16.mxu0 0
        %953 = vmatpush2.bf16.msra.mxu0 0
        %954 = vmatprep.subr.bf16.mxu0 0
        %955 = vmatpush2.bf16.msra.mxu0 0
        %956 = vmatprep.subr.bf16.mxu0 0
        %957 = vmatpush2.bf16.msra.mxu0 0
        %958 = vmatprep.mubr.bf16.mxu0 0
        %959 = vmatmul.mubr.bf16.gmra.mxu0 %v924
        %v960 = vpop.f32.mrf.mxu0
        %v961 = vadd.f32 %v898, %v960
        %v962 = vpop.f32.mrf.mxu0
        %v963 = vpop.f32.mrf.mxu0
        %v964 = vpop.f32.mrf.mxu0
        %965 = vdwg.mxu0
        %v966 = vmax.f32 %v961, 0.0
        %v967 = vpack.c.bf16 %v966, %v966
        %s968 = scalar_lea.vmem [#allocation4], 192
        %v969 = vld [vmem:[%s968] sm:$0xf]
        %v970 = vld [vmem:[%s968 + $0x4] sm:$0xf]
        %v971 = vld [vmem:[%s968 + $0x8] sm:$0xf]
        %v972 = vld [vmem:[%s968 + $0xc] sm:$0xf]
        %v973 = vld [vmem:[%s968 + $0x10] sm:$0xf]
        %v974 = vld [vmem:[%s968 + $0x14] sm:$0xf]
        %v975 = vld [vmem:[%s968 + $0x18] sm:$0xf]
        %v976 = vld [vmem:[%s968 + $0x1c] sm:$0xf]
        %v977 = vld [vmem:[#allocation6 + $0x7] sm:$0x1]
        %v978 = vlaneseq
        %v979 = vshrl.u32 %v978, 7
        %v980 = vsub.s32 0, %v979
        %v981 = vrot.slane %v977, %v980
        %v990 = vunpack.c.l.b16 %v969
        %v991 = vunpack.c.l.b16 %v970
        %v992 = vunpack.c.l.b16 %v971
        %v993 = vunpack.c.l.b16 %v972
        %v994 = vunpack.c.l.b16 %v973
        %v995 = vunpack.c.l.b16 %v974
        %v996 = vunpack.c.l.b16 %v975
        %v997 = vunpack.c.l.b16 %v976
        %v998 = vpack.c.b16 %v991, %v990
        %v999 = vpack.c.b16 %v993, %v992
        %v1000 = vpack.c.b16 %v995, %v994
        %v1001 = vpack.c.b16 %v997, %v996
        %v1007 = vsel %vm502, %v967, 0
        %1009 = vmatprep.subr.bf16.mxu0 0
        %1010 = vmatpush1.bf16.msra.mxu0 0
        %1011 = vmatprep.subr.bf16.mxu0 0
        %1012 = vmatpush1.bf16.msra.mxu0 0
        %1013 = vmatprep.subr.bf16.mxu0 0
        %1014 = vmatpush1.bf16.msra.mxu0 0
        %1015 = vmatprep.subr.bf16.mxu0 0
        %1016 = vmatpush1.bf16.msra.mxu0 0
        %1017 = vmatprep.subr.bf16.mxu0 0
        %1018 = vmatpush1.bf16.msra.mxu0 %v1001
        %1019 = vmatprep.subr.bf16.mxu0 0
        %1020 = vmatpush1.bf16.msra.mxu0 %v1000
        %1021 = vmatprep.subr.bf16.mxu0 0
        %1022 = vmatpush1.bf16.msra.mxu0 %v999
        %1023 = vmatprep.subr.bf16.mxu0 0
        %1024 = vmatpush1.bf16.msra.mxu0 %v998
        %1025 = vmatprep.subr.bf16.mxu0 0
        %1026 = vmatpush2.bf16.msra.mxu0 0
        %1027 = vmatprep.subr.bf16.mxu0 0
        %1028 = vmatpush2.bf16.msra.mxu0 0
        %1029 = vmatprep.subr.bf16.mxu0 0
        %1030 = vmatpush2.bf16.msra.mxu0 0
        %1031 = vmatprep.subr.bf16.mxu0 0
        %1032 = vmatpush2.bf16.msra.mxu0 0
        %1033 = vmatprep.subr.bf16.mxu0 0
        %1034 = vmatpush2.bf16.msra.mxu0 0
        %1035 = vmatprep.subr.bf16.mxu0 0
        %1036 = vmatpush2.bf16.msra.mxu0 0
        %1037 = vmatprep.subr.bf16.mxu0 0
        %1038 = vmatpush2.bf16.msra.mxu0 0
        %1039 = vmatprep.subr.bf16.mxu0 0
        %1040 = vmatpush2.bf16.msra.mxu0 0
        %1041 = vmatprep.mubr.bf16.mxu0 0
        %1042 = vmatmul.mubr.bf16.gmra.mxu0 %v1007
        %v1043 = vpop.f32.mrf.mxu0
        %v1044 = vadd.f32 %v981, %v1043
        %v1045 = vpop.f32.mrf.mxu0
        %v1046 = vpop.f32.mrf.mxu0
        %v1047 = vpop.f32.mrf.mxu0
        %1048 = vdwg.mxu0
        %v1049 = vmax.f32 %v1044, 0.0
        %v1050 = vpack.c.bf16 %v1049, %v1049
        %v1051 = vld [vmem:[%s6] sm:$0xf]
        %v1052 = vld [vmem:[%s6 + $0x4] sm:$0xf]
        %v1053 = vld [vmem:[%s6 + $0x8] sm:$0xf]
        %v1054 = vld [vmem:[%s6 + $0xc] sm:$0xf]
        %v1055 = vld [vmem:[%s6 + $0x10] sm:$0xf]
        %v1056 = vld [vmem:[%s6 + $0x14] sm:$0xf]
        %v1057 = vld [vmem:[%s6 + $0x18] sm:$0xf]
        %v1058 = vld [vmem:[%s6 + $0x1c] sm:$0xf]
        %v1067 = vunpack.c.l.b16 %v1051
        %v1068 = vunpack.c.l.b16 %v1052
        %v1069 = vunpack.c.l.b16 %v1053
        %v1070 = vunpack.c.l.b16 %v1054
        %v1071 = vunpack.c.l.b16 %v1055
        %v1072 = vunpack.c.l.b16 %v1056
        %v1073 = vunpack.c.l.b16 %v1057
        %v1074 = vunpack.c.l.b16 %v1058
        %v1075 = vpack.c.b16 %v1068, %v1067
        %v1076 = vpack.c.b16 %v1070, %v1069
        %v1077 = vpack.c.b16 %v1072, %v1071
        %v1078 = vpack.c.b16 %v1074, %v1073
        %v1084 = vsel %vm502, %v1050, 0
        %1086 = vmatprep.subr.bf16.mxu0 0
        %1087 = vmatpush1.bf16.msra.mxu0 0
        %1088 = vmatprep.subr.bf16.mxu0 0
        %1089 = vmatpush1.bf16.msra.mxu0 0
        %1090 = vmatprep.subr.bf16.mxu0 0
        %1091 = vmatpush1.bf16.msra.mxu0 0
        %1092 = vmatprep.subr.bf16.mxu0 0
        %1093 = vmatpush1.bf16.msra.mxu0 0
        %1094 = vmatprep.subr.bf16.mxu0 0
        %1095 = vmatpush1.bf16.msra.mxu0 %v1078
        %1096 = vmatprep.subr.bf16.mxu0 0
        %1097 = vmatpush1.bf16.msra.mxu0 %v1077
        %1098 = vmatprep.subr.bf16.mxu0 0
        %1099 = vmatpush1.bf16.msra.mxu0 %v1076
        %1100 = vmatprep.subr.bf16.mxu0 0
        %1101 = vmatpush1.bf16.msra.mxu0 %v1075
        %1102 = vmatprep.subr.bf16.mxu0 0
        %1103 = vmatpush2.bf16.msra.mxu0 0
        %1104 = vmatprep.subr.bf16.mxu0 0
        %1105 = vmatpush2.bf16.msra.mxu0 0
        %1106 = vmatprep.subr.bf16.mxu0 0
        %1107 = vmatpush2.bf16.msra.mxu0 0
        %1108 = vmatprep.subr.bf16.mxu0 0
        %1109 = vmatpush2.bf16.msra.mxu0 0
        %1110 = vmatprep.subr.bf16.mxu0 0
        %1111 = vmatpush2.bf16.msra.mxu0 0
        %1112 = vmatprep.subr.bf16.mxu0 0
        %1113 = vmatpush2.bf16.msra.mxu0 0
        %1114 = vmatprep.subr.bf16.mxu0 0
        %1115 = vmatpush2.bf16.msra.mxu0 0
        %1116 = vmatprep.subr.bf16.mxu0 0
        %1117 = vmatpush2.bf16.msra.mxu0 0
        %1118 = vmatprep.mubr.bf16.mxu0 0
        %1119 = vmatmul.mubr.bf16.gmra.mxu0 %v1084
        %v1120 = vpop.f32.mrf.mxu0
        %v1121 = vadd.f32 0.0, %v1120
        %v1122 = vpop.f32.mrf.mxu0
        %v1123 = vpop.f32.mrf.mxu0
        %v1124 = vpop.f32.mrf.mxu0
        %1125 = vdwg.mxu0
        %v1126 = vld [vmem:[#allocation6 + $0x8] sm:$0x1]
        %v1127 = vlaneseq
        %v1128 = vshrl.u32 %v1127, 7
        %v1129 = vsub.s32 0, %v1128
        %v1130 = vrot.slane %v1126, %v1129
        %v1131 = vadd.f32 %v1121, %v1130
        %v1132 = vpack.c.bf16 %v1131, %v1131
        %v1133 = vld [vmem:[%s5] sm:$0xf]
        %v1134 = vld [vmem:[%s5 + $0x4] sm:$0xf]
        %v1135 = vld [vmem:[%s5 + $0x8] sm:$0xf]
        %v1136 = vld [vmem:[%s5 + $0xc] sm:$0xf]
        %v1137 = vld [vmem:[%s5 + $0x10] sm:$0xf]
        %v1138 = vld [vmem:[%s5 + $0x14] sm:$0xf]
        %v1139 = vld [vmem:[%s5 + $0x18] sm:$0xf]
        %v1140 = vld [vmem:[%s5 + $0x1c] sm:$0xf]
        %v1141 = vld [vmem:[%s384] sm:$0xff]
        %v1150 = vunpack.c.l.b16 %v1133
        %v1151 = vunpack.c.l.b16 %v1134
        %v1152 = vunpack.c.l.b16 %v1135
        %v1153 = vunpack.c.l.b16 %v1136
        %v1154 = vunpack.c.l.b16 %v1137
        %v1155 = vunpack.c.l.b16 %v1138
        %v1156 = vunpack.c.l.b16 %v1139
        %v1157 = vunpack.c.l.b16 %v1140
        %v1158 = vpack.c.b16 %v1151, %v1150
        %v1159 = vpack.c.b16 %v1153, %v1152
        %v1160 = vpack.c.b16 %v1155, %v1154
        %v1161 = vpack.c.b16 %v1157, %v1156
        %v1167 = vsel %vm502, %v1132, 0
        %1169 = vmatprep.subr.bf16.mxu0 0
        %1170 = vmatpush1.bf16.msra.mxu0 0
        %1171 = vmatprep.subr.bf16.mxu0 0
        %1172 = vmatpush1.bf16.msra.mxu0 0
        %1173 = vmatprep.subr.bf16.mxu0 0
        %1174 = vmatpush1.bf16.msra.mxu0 0
        %1175 = vmatprep.subr.bf16.mxu0 0
        %1176 = vmatpush1.bf16.msra.mxu0 0
        %1177 = vmatprep.subr.bf16.mxu0 0
        %1178 = vmatpush1.bf16.msra.mxu0 %v1161
        %1179 = vmatprep.subr.bf16.mxu0 0
        %1180 = vmatpush1.bf16.msra.mxu0 %v1160
        %1181 = vmatprep.subr.bf16.mxu0 0
        %1182 = vmatpush1.bf16.msra.mxu0 %v1159
        %1183 = vmatprep.subr.bf16.mxu0 0
        %1184 = vmatpush1.bf16.msra.mxu0 %v1158
        %1185 = vmatprep.subr.bf16.mxu0 0
        %1186 = vmatpush2.bf16.msra.mxu0 0
        %1187 = vmatprep.subr.bf16.mxu0 0
        %1188 = vmatpush2.bf16.msra.mxu0 0
        %1189 = vmatprep.subr.bf16.mxu0 0
        %1190 = vmatpush2.bf16.msra.mxu0 0
        %1191 = vmatprep.subr.bf16.mxu0 0
        %1192 = vmatpush2.bf16.msra.mxu0 0
        %1193 = vmatprep.subr.bf16.mxu0 0
        %1194 = vmatpush2.bf16.msra.mxu0 0
        %1195 = vmatprep.subr.bf16.mxu0 0
        %1196 = vmatpush2.bf16.msra.mxu0 0
        %1197 = vmatprep.subr.bf16.mxu0 0
        %1198 = vmatpush2.bf16.msra.mxu0 0
        %1199 = vmatprep.subr.bf16.mxu0 0
        %1200 = vmatpush2.bf16.msra.mxu0 0
        %1201 = vmatprep.mubr.bf16.mxu0 0
        %1202 = vmatmul.mubr.bf16.gmra.mxu0 %v1167
        %v1203 = vpop.f32.mrf.mxu0
        %v1204 = vadd.f32 %v1141, %v1203
        %v1205 = vpop.f32.mrf.mxu0
        %v1206 = vpop.f32.mrf.mxu0
        %v1207 = vpop.f32.mrf.mxu0
        %1208 = vdwg.mxu0
        %v1209 = vmax.f32 %v1204, 0.0
        %v1210 = vpack.c.bf16 %v1209, %v1209
        %v1211 = vld [vmem:[%s7] sm:$0xf]
        %v1212 = vld [vmem:[%s7 + $0x4] sm:$0xf]
        %v1213 = vld [vmem:[%s7 + $0x8] sm:$0xf]
        %v1214 = vld [vmem:[%s7 + $0xc] sm:$0xf]
        %v1219 = vunpack.c.l.b16 %v1211
        %v1220 = vunpack.c.l.b16 %v1212
        %v1221 = vunpack.c.l.b16 %v1213
        %v1222 = vunpack.c.l.b16 %v1214
        %v1223 = vpack.c.b16 %v1220, %v1219
        %v1224 = vpack.c.b16 %v1222, %v1221
        %1228 = vrot.lane.b32.xlu0 %v1121, 64
        %v1229 = vpop.permute.xlu0 %1228
        %vm1231 = vcmask 261120
        %v1233 = vsel %vm1231, %v1210, 0
        %1235 = vmatprep.subr.bf16.mxu0 0
        %1236 = vmatpush1.bf16.msra.mxu0 0
        %1237 = vmatprep.subr.bf16.mxu0 0
        %1238 = vmatpush1.bf16.msra.mxu0 0
        %1239 = vmatprep.subr.bf16.mxu0 0
        %1240 = vmatpush1.bf16.msra.mxu0 0
        %1241 = vmatprep.subr.bf16.mxu0 0
        %1242 = vmatpush1.bf16.msra.mxu0 0
        %1243 = vmatprep.subr.bf16.mxu0 0
        %1244 = vmatpush1.bf16.msra.mxu0 0
        %1245 = vmatprep.subr.bf16.mxu0 0
        %1246 = vmatpush1.bf16.msra.mxu0 0
        %1247 = vmatprep.subr.bf16.mxu0 0
        %1248 = vmatpush1.bf16.msra.mxu0 %v1224
        %1249 = vmatprep.subr.bf16.mxu0 0
        %1250 = vmatpush1.bf16.msra.mxu0 %v1223
        %1251 = vmatprep.subr.bf16.mxu0 0
        %1252 = vmatpush2.bf16.msra.mxu0 0
        %1253 = vmatprep.subr.bf16.mxu0 0
        %1254 = vmatpush2.bf16.msra.mxu0 0
        %1255 = vmatprep.subr.bf16.mxu0 0
        %1256 = vmatpush2.bf16.msra.mxu0 0
        %1257 = vmatprep.subr.bf16.mxu0 0
        %1258 = vmatpush2.bf16.msra.mxu0 0
        %1259 = vmatprep.subr.bf16.mxu0 0
        %1260 = vmatpush2.bf16.msra.mxu0 0
        %1261 = vmatprep.subr.bf16.mxu0 0
        %1262 = vmatpush2.bf16.msra.mxu0 0
        %1263 = vmatprep.subr.bf16.mxu0 0
        %1264 = vmatpush2.bf16.msra.mxu0 0
        %1265 = vmatprep.subr.bf16.mxu0 0
        %1266 = vmatpush2.bf16.msra.mxu0 0
        %1267 = vmatprep.mubr.bf16.mxu0 0
        %1268 = vmatmul.mubr.bf16.gmra.mxu0 %v1233
        %v1269 = vpop.f32.mrf.mxu0
        %v1270 = vadd.f32 %v1229, %v1269
        %v1271 = vpop.f32.mrf.mxu0
        %v1272 = vpop.f32.mrf.mxu0
        %v1273 = vpop.f32.mrf.mxu0
        %1274 = vdwg.mxu0
        %v1275 = vld [vmem:[%s8] sm:$0x1]
        %v1277 = vlaneseq
        %v1278 = vshrl.u32 %v1277, 7
        %v1279 = vsub.s32 0, %v1278
        %v1280 = vrot.slane %v1275, %v1279
        %v1282 = vadd.f32 %v1270, %v1280
        %vm1283 = vcmask 39936
        %1284 = vst.msk [vmem:[%s388] sm:$0xff] %vm1283, %v1282
        %p1285 = scmp.lt.s32.totalorder %s22, 1
        %s1286 = scalar_select %p1285, %s22, 1
        %s1287 = smul.addr %s1286, 8
        %s1288 = scalar_lea.vmem %s9, %s1287
        // Predicated region
        $region69: #{tpu_custom_call.1} parent=55 // pred_check
          %p1289 = pneg %p239
        $region70: #{tpu_custom_call.1} parent=55 // pred_check_branch
          %1291 = sbr.rel (%p1289) target = $region72
        $region71: #{tpu_custom_call.1} parent=55 // pred_region
          _
        $region72: #{tpu_custom_call.1} parent=55 // pred_fallthru
          _
      $region56: #{tpu_custom_call.1} parent=5 // pred_fallthru
        _
      %p1292 = scmp.le.s32.totalorder 2, %s17
      // Predicated region
      $region73: #{tpu_custom_call.1} parent=5 // pred_check
        %p1293 = pneg %p1292
      $region74: #{tpu_custom_call.1} parent=5 // pred_check_branch
        %1295 = sbr.rel (%p1293) target = $region76
      $region75: #{tpu_custom_call.1} parent=5 // pred_region
        %s1296 = ssub.s32 %s17, 2
        // Predicated region
        $region77: #{tpu_custom_call.1} parent=75 // pred_check
          %p1297 = pneg %p245
        $region78: #{tpu_custom_call.1} parent=75 // pred_check_branch
          %1299 = sbr.rel (%p1297) target = $region80
        $region79: #{tpu_custom_call.1} parent=75 // pred_region
          %p1300 = scmp.lt.s32.totalorder %s23, 1
          %s1301 = scalar_select %p1300, %s23, 1
          %s1302 = smul.addr %s1301, 8
          %s1303 = scalar_lea.vmem %s9, %s1302
        $region80: #{tpu_custom_call.1} parent=75 // pred_fallthru
          _
      $region76: #{tpu_custom_call.1} parent=5 // pred_fallthru
        _
    $region6: #{tpu_custom_call.1} parent=1 // loop_footer
      %s21 = sadd.s32 1, %s17
    $region7: #{tpu_custom_call.1} parent=1 // loop_footer_branch
      %16 = sbr.rel target = $region3
    $region8: #{tpu_custom_call.1} parent=1 // loop_exit
      _
    %1304 = vsyncpa [#allocation3], 1
    %s1305 = scalar_lea.sflag [#allocation3], 1
    %1306 = vsyncpa %s1305, 1
    %1307 = vsyncpa [#allocation5], 1

</llo_original>
